<compile_context>
chip_gen: v6e
topology: v6e:2x2x1
jax: 0.10.0
libtpu: 0.0.40
codegen_flags: <defaults>
</compile_context>

<pallas_src>
import jax
import jax.numpy as jnp
from jax.experimental import pallas as pl
from jax.experimental.pallas import tpu as pltpu


# ----------------------------------------------------------------------------
# Fused Pallas kernel
# ----------------------------------------------------------------------------
def fcn_fused_kernel(x_ref, w1_ref, ss1_ref, w2_ref, ss2_ref, w3_ref, ss3_ref,
                     lw_ref, lb_ref, o_ref, pad1_ref, pad2_ref, pad3_ref):
    """Whole FCN forward for one tile of B batch rows.

    x_ref   : (B, L, C_in)           input activations (compute dtype)
    w*_ref  : (K, C_in, C_out)       conv weights, one (C_in, C_out) per tap
    ss*_ref : (2, C_out)             row 0 = BN scale, row 1 = BN shift
                                     (conv bias already folded into the shift)
    lw_ref  : (C_last, num_classes)  final Linear weight
    lb_ref  : (1, num_classes)       final Linear bias
    o_ref   : (B, 1, num_classes)    output
    pad*_ref: (B, L + K - 1, C_in)   f32 VMEM scratch, padded input per block
    """
    B, L, _ = x_ref.shape

    def conv_bn_relu(pad_ref, w_ref, ss_ref, x_val):
        Bp, Lp, c_in = pad_ref.shape
        K = w_ref.shape[0]
        left = (K - 1) // 2                       # conv1d_same_padding, stride=1
        right = Lp - L - left
        # in-kernel "same" padding: zero edges, activations in the middle
        if left:
            pad_ref[:, :left, :] = jnp.zeros((Bp, left, c_in), pad_ref.dtype)
        if right:
            pad_ref[:, left + L:, :] = jnp.zeros((Bp, right, c_in), pad_ref.dtype)
        pad_ref[:, left:left + L, :] = x_val.astype(pad_ref.dtype)

        # K is small & static (7/5/3): unrolled tap loop, each tap one MXU
        # matmul with M = B*L rows.  First tap initializes the accumulator.
        def tap(t):
            lhs = pad_ref[:, t:t + L, :].reshape(Bp * L, c_in).astype(w_ref.dtype)
            return jnp.dot(lhs, w_ref[t], preferred_element_type=jnp.float32)

        acc = tap(0)
        for t in range(1, K):
            acc = acc + tap(t)

        y = acc * ss_ref[0:1, :] + ss_ref[1:2, :]         # BN(eval) + folded bias
        return jnp.maximum(y, 0.0)                        # (B*L, c_out) f32

    y = conv_bn_relu(pad1_ref, w1_ref, ss1_ref, x_ref[...])
    y = conv_bn_relu(pad2_ref, w2_ref, ss2_ref, y.reshape(B, L, -1))
    y = conv_bn_relu(pad3_ref, w3_ref, ss3_ref, y.reshape(B, L, -1))

    # head: global mean over time + Linear, fused (no HBM round-trip)
    c_last = lw_ref.shape[0]
    m = jnp.mean(y.reshape(B, L, c_last), axis=1)         # (B, C_last) f32
    out = jnp.dot(m, lw_ref[...], preferred_element_type=jnp.float32) + lb_ref[...]
    o_ref[...] = out[:, None, :]


# ----------------------------------------------------------------------------
# Wrapper
# ----------------------------------------------------------------------------
def _pick_batch_tile(N, L):
    """Rows per grid step: fill the MXU M dim (~256 rows) without blowing VMEM,
    keeping >= 2 grid steps when the batch allows it (v7x has 2 TensorCores)."""
    target = max(1, -(-256 // L))            # ceil(256 / L)
    cap = max(1, 1024 // L)                  # keep scratch / register use modest
    want = min(target, cap, N)
    b = 1
    for d in range(1, N + 1):
        if N % d == 0 and d <= want:
            b = d
    if N > 1 and N // b < 2:                 # give both v7x TensorCores work
        for d in range(b - 1, 0, -1):
            if N % d == 0:
                b = d
                break
    return b


def fcn_forward(params, x_ncl, eps=1e-5, compute_dtype=jnp.float32):
    """x_ncl: (N, C_in, L) float32 (PyTorch layout). Returns (N, num_classes)."""
    N, C_in, L = x_ncl.shape
    x = jnp.transpose(x_ncl, (0, 2, 1)).astype(compute_dtype)      # -> NLC

    ws, sss, ks, cs = [], [], [], []
    for blk in params["blocks"]:
        w = jnp.transpose(blk["w"], (2, 1, 0)).astype(compute_dtype)  # (K,Cin,Cout)
        scale = blk["gamma"] / jnp.sqrt(blk["var"] + eps)
        shift = blk["beta"] + (blk["b"] - blk["mean"]) * scale        # fold conv bias
        ws.append(w)
        sss.append(jnp.stack([scale, shift], axis=0).astype(jnp.float32))  # (2, Cout)
        ks.append(w.shape[0])
        cs.append(w.shape[2])

    lw = params["lin_w"].T.astype(jnp.float32)                      # (C_last, nc)
    lb = params["lin_b"].reshape(1, -1).astype(jnp.float32)
    nc = lw.shape[1]

    B = _pick_batch_tile(N, L)
    grid = (N // B,)

    out = pl.pallas_call(
        fcn_fused_kernel,
        out_shape=jax.ShapeDtypeStruct((N, 1, nc), jnp.float32),
        grid=grid,
        in_specs=[
            pl.BlockSpec((B, L, C_in), lambda i: (i, 0, 0)),
            pl.BlockSpec((ks[0], C_in, cs[0]), lambda i: (0, 0, 0)),
            pl.BlockSpec((2, cs[0]), lambda i: (0, 0)),
            pl.BlockSpec((ks[1], cs[0], cs[1]), lambda i: (0, 0, 0)),
            pl.BlockSpec((2, cs[1]), lambda i: (0, 0)),
            pl.BlockSpec((ks[2], cs[1], cs[2]), lambda i: (0, 0, 0)),
            pl.BlockSpec((2, cs[2]), lambda i: (0, 0)),
            pl.BlockSpec((cs[2], nc), lambda i: (0, 0)),
            pl.BlockSpec((1, nc), lambda i: (0, 0)),
        ],
        out_specs=pl.BlockSpec((B, 1, nc), lambda i: (i, 0, 0)),
        scratch_shapes=[
            pltpu.VMEM((B, L + ks[0] - 1, C_in), jnp.float32),
            pltpu.VMEM((B, L + ks[1] - 1, cs[0]), jnp.float32),
            pltpu.VMEM((B, L + ks[2] - 1, cs[1]), jnp.float32),
        ],
        compiler_params=pltpu.CompilerParams(
            dimension_semantics=("parallel",),
            vmem_limit_bytes=32 * 1024 * 1024),
    )(x, ws[0], sss[0], ws[1], sss[1], ws[2], sss[2], lw, lb)
    return out[:, 0, :]


# ----------------------------------------------------------------------------
# Parameter init + pure-JAX reference (correctness check only)
# ----------------------------------------------------------------------------
def init_params(key, in_channels, num_classes=1):
    cfg = [(in_channels, 128, 7), (128, 256, 5), (256, 128, 3)]
    params = {"blocks": []}
    for (ci, co, k) in cfg:
        key, k1, k2, k3, k4, k5 = jax.random.split(key, 6)
        params["blocks"].append({
            # PyTorch conv1d weight layout (C_out, C_in, K)
            "w": 0.1 * jax.random.normal(k1, (co, ci, k), jnp.float32),
            "b": 0.1 * jax.random.normal(k2, (co,), jnp.float32),
            "gamma": 1.0 + 0.05 * jax.random.normal(k3, (co,), jnp.float32),
            "beta": 0.05 * jax.random.normal(k4, (co,), jnp.float32),
            "mean": 0.05 * jax.random.normal(k5, (co,), jnp.float32),
            "var": jnp.ones((co,), jnp.float32),
        })
    key, k1, k2 = jax.random.split(key, 3)
    params["lin_w"] = 0.1 * jax.random.normal(k1, (num_classes, 128), jnp.float32)
    params["lin_b"] = 0.1 * jax.random.normal(k2, (num_classes,), jnp.float32)
    return params


def fcn_reference(params, x_ncl, eps=1e-5):
    y = x_ncl
    for blk in params["blocks"]:
        k = blk["w"].shape[2]
        pad = (k - 1) // 2
        y = jax.lax.conv_general_dilated(
            y, blk["w"], window_strides=(1,), padding=[(pad, pad)],
            dimension_numbers=("NCH", "OIH", "NCH"))
        y = y + blk["b"][None, :, None]
        scale = blk["gamma"] / jnp.sqrt(blk["var"] + eps)
        shift = blk["beta"] - blk["mean"] * scale
        y = y * scale[None, :, None] + shift[None, :, None]
        y = jnp.maximum(y, 0.0)
    m = jnp.mean(y, axis=-1)                          # (N, 128)
    return m @ params["lin_w"].T + params["lin_b"]


# ----------------------------------------------------------------------------
if __name__ == "__main__":
    key = jax.random.PRNGKey(0)
    key, xkey = jax.random.split(key)

    N, C_IN, L, NUM_CLASSES = 2, 4, 16, 1
    x = jax.random.normal(xkey, (N, C_IN, L), jnp.float32)    # PyTorch NCL input
    params = init_params(key, C_IN, NUM_CLASSES)

    ref = jax.block_until_ready(fcn_reference(params, x))

    # f32 path: bit-for-bit faithful to the module semantics
    out_f32 = jax.block_until_ready(
        fcn_forward(params, x, compute_dtype=jnp.float32))
    assert out_f32.shape == (N, NUM_CLASSES), out_f32.shape
    assert jnp.allclose(out_f32, ref, rtol=1e-4, atol=1e-4), (out_f32, ref)

    # bf16-MXU path (perf option for v6e/v7x); f32 accumulation, looser check
    out_bf16 = jax.block_until_ready(
        fcn_forward(params, x, compute_dtype=jnp.bfloat16))
    assert jnp.allclose(out_bf16, ref, rtol=5e-2, atol=5e-2), (out_bf16, ref)

    print("KERNEL_OK")
</pallas_src>

<mosaic_0001>
module attributes {stable_mosaic.version = 11 : i64} {
  func.func @fcn_fused_kernel(%arg0: i32, %arg1: memref<1x16x4xf32, #tpu.memory_space<vmem>>, %arg2: memref<7x4x128xf32, #tpu.memory_space<vmem>>, %arg3: memref<2x128xf32, #tpu.memory_space<vmem>>, %arg4: memref<5x128x256xf32, #tpu.memory_space<vmem>>, %arg5: memref<2x256xf32, #tpu.memory_space<vmem>>, %arg6: memref<3x256x128xf32, #tpu.memory_space<vmem>>, %arg7: memref<2x128xf32, #tpu.memory_space<vmem>>, %arg8: memref<128x1xf32, #tpu.memory_space<vmem>>, %arg9: memref<1x1xf32, #tpu.memory_space<vmem>>, %arg10: memref<1x1x1xf32, #tpu.memory_space<vmem>>, %arg11: memref<1x22x4xf32, #tpu.memory_space<vmem>>, %arg12: memref<1x20x128xf32, #tpu.memory_space<vmem>>, %arg13: memref<1x18x256xf32, #tpu.memory_space<vmem>>) attributes {dimension_semantics = [#tpu.dimension_semantics<parallel>], iteration_bounds = array<i64: 2>, scalar_prefetch = 0 : i64, scratch_operands = 3 : i64, tpu.core_type = #tpu.core_type<tc>, window_params = [{transform_indices = @transform_0, window_bounds = array<i64: 1, 16, 4>}, {pipeline_mode = #tpu.pipeline_mode<synchronous>, transform_indices = @transform_1, window_bounds = array<i64: 7, 4, 128>}, {pipeline_mode = #tpu.pipeline_mode<synchronous>, transform_indices = @transform_2, window_bounds = array<i64: 2, 128>}, {pipeline_mode = #tpu.pipeline_mode<synchronous>, transform_indices = @transform_3, window_bounds = array<i64: 5, 128, 256>}, {pipeline_mode = #tpu.pipeline_mode<synchronous>, transform_indices = @transform_4, window_bounds = array<i64: 2, 256>}, {pipeline_mode = #tpu.pipeline_mode<synchronous>, transform_indices = @transform_5, window_bounds = array<i64: 3, 256, 128>}, {pipeline_mode = #tpu.pipeline_mode<synchronous>, transform_indices = @transform_6, window_bounds = array<i64: 2, 128>}, {pipeline_mode = #tpu.pipeline_mode<synchronous>, transform_indices = @transform_7, window_bounds = array<i64: 128, 1>}, {pipeline_mode = #tpu.pipeline_mode<synchronous>, transform_indices = @transform_8, window_bounds = array<i64: 1, 1>}, {transform_indices = @transform_9, window_bounds = array<i64: 1, 1, 1>}]} {
    %c0 = arith.constant 0 : index
    %c0_0 = arith.constant 0 : index
    %c0_1 = arith.constant 0 : index
    %0 = vector.load %arg1[%c0, %c0_0, %c0_1] : memref<1x16x4xf32, #tpu.memory_space<vmem>>, vector<1x16x4xf32>
    %cst = arith.constant 0.000000e+00 : f32
    %1 = vector.broadcast %cst : f32 to vector<1x3x4xf32>
    %c0_2 = arith.constant 0 : index
    %c0_3 = arith.constant 0 : index
    %c0_4 = arith.constant 0 : index
    %2 = vector.load %arg11[%c0_2, %c0_3, %c0_4] : memref<1x22x4xf32, #tpu.memory_space<vmem>>, vector<1x3x4xf32>
    tpu.vector_store %arg11[%c0_2, %c0_3, %c0_4], %1 {strides = array<i32>} : memref<1x22x4xf32, #tpu.memory_space<vmem>>, vector<1x3x4xf32>,
    %cst_5 = arith.constant 0.000000e+00 : f32
    %3 = vector.broadcast %cst_5 : f32 to vector<1x3x4xf32>
    %c0_6 = arith.constant 0 : index
    %c19 = arith.constant 19 : index
    %c0_7 = arith.constant 0 : index
    %4 = vector.load %arg11[%c0_6, %c19, %c0_7] : memref<1x22x4xf32, #tpu.memory_space<vmem>>, vector<1x3x4xf32>
    tpu.vector_store %arg11[%c0_6, %c19, %c0_7], %3 {strides = array<i32>} : memref<1x22x4xf32, #tpu.memory_space<vmem>>, vector<1x3x4xf32>,
    %c0_8 = arith.constant 0 : index
    %c3 = arith.constant 3 : index
    %c0_9 = arith.constant 0 : index
    %5 = vector.load %arg11[%c0_8, %c3, %c0_9] : memref<1x22x4xf32, #tpu.memory_space<vmem>>, vector<1x16x4xf32>
    tpu.vector_store %arg11[%c0_8, %c3, %c0_9], %0 {strides = array<i32>} : memref<1x22x4xf32, #tpu.memory_space<vmem>>, vector<1x16x4xf32>,
    %c0_10 = arith.constant 0 : index
    %c0_11 = arith.constant 0 : index
    %c0_12 = arith.constant 0 : index
    %6 = vector.load %arg11[%c0_10, %c0_11, %c0_12] : memref<1x22x4xf32, #tpu.memory_space<vmem>>, vector<1x16x4xf32>
    %7 = vector.shape_cast %6 : vector<1x16x4xf32> to vector<16x4xf32>
    %c0_13 = arith.constant 0 : index
    %c0_14 = arith.constant 0 : index
    %c0_15 = arith.constant 0 : index
    %8 = vector.load %arg2[%c0_13, %c0_14, %c0_15] : memref<7x4x128xf32, #tpu.memory_space<vmem>>, vector<1x4x128xf32>
    %9 = vector.shape_cast %8 : vector<1x4x128xf32> to vector<4x128xf32>
    %cst_16 = arith.constant dense<0.000000e+00> : vector<16x128xf32>
    %10 = tpu.matmul %7, %9, %cst_16 {dimension_numbers = #tpu.dot_dimension_numbers<[1], [0], [0], [1], [0, 0, 1, 1], [], []>} : vector<16x4xf32>, vector<4x128xf32>, vector<16x128xf32> -> vector<16x128xf32>
    %c0_17 = arith.constant 0 : index
    %c1 = arith.constant 1 : index
    %c0_18 = arith.constant 0 : index
    %11 = vector.load %arg11[%c0_17, %c1, %c0_18] : memref<1x22x4xf32, #tpu.memory_space<vmem>>, vector<1x16x4xf32>
    %12 = vector.shape_cast %11 : vector<1x16x4xf32> to vector<16x4xf32>
    %c1_19 = arith.constant 1 : index
    %c0_20 = arith.constant 0 : index
    %c0_21 = arith.constant 0 : index
    %13 = vector.load %arg2[%c1_19, %c0_20, %c0_21] : memref<7x4x128xf32, #tpu.memory_space<vmem>>, vector<1x4x128xf32>
    %14 = vector.shape_cast %13 : vector<1x4x128xf32> to vector<4x128xf32>
    %cst_22 = arith.constant dense<0.000000e+00> : vector<16x128xf32>
    %15 = tpu.matmul %12, %14, %cst_22 {dimension_numbers = #tpu.dot_dimension_numbers<[1], [0], [0], [1], [0, 0, 1, 1], [], []>} : vector<16x4xf32>, vector<4x128xf32>, vector<16x128xf32> -> vector<16x128xf32>
    %16 = arith.addf %10, %15 : vector<16x128xf32>
    %c0_23 = arith.constant 0 : index
    %c2 = arith.constant 2 : index
    %c0_24 = arith.constant 0 : index
    %17 = vector.load %arg11[%c0_23, %c2, %c0_24] : memref<1x22x4xf32, #tpu.memory_space<vmem>>, vector<1x16x4xf32>
    %18 = vector.shape_cast %17 : vector<1x16x4xf32> to vector<16x4xf32>
    %c2_25 = arith.constant 2 : index
    %c0_26 = arith.constant 0 : index
    %c0_27 = arith.constant 0 : index
    %19 = vector.load %arg2[%c2_25, %c0_26, %c0_27] : memref<7x4x128xf32, #tpu.memory_space<vmem>>, vector<1x4x128xf32>
    %20 = vector.shape_cast %19 : vector<1x4x128xf32> to vector<4x128xf32>
    %cst_28 = arith.constant dense<0.000000e+00> : vector<16x128xf32>
    %21 = tpu.matmul %18, %20, %cst_28 {dimension_numbers = #tpu.dot_dimension_numbers<[1], [0], [0], [1], [0, 0, 1, 1], [], []>} : vector<16x4xf32>, vector<4x128xf32>, vector<16x128xf32> -> vector<16x128xf32>
    %22 = arith.addf %16, %21 : vector<16x128xf32>
    %c0_29 = arith.constant 0 : index
    %c3_30 = arith.constant 3 : index
    %c0_31 = arith.constant 0 : index
    %23 = vector.load %arg11[%c0_29, %c3_30, %c0_31] : memref<1x22x4xf32, #tpu.memory_space<vmem>>, vector<1x16x4xf32>
    %24 = vector.shape_cast %23 : vector<1x16x4xf32> to vector<16x4xf32>
    %c3_32 = arith.constant 3 : index
    %c0_33 = arith.constant 0 : index
    %c0_34 = arith.constant 0 : index
    %25 = vector.load %arg2[%c3_32, %c0_33, %c0_34] : memref<7x4x128xf32, #tpu.memory_space<vmem>>, vector<1x4x128xf32>
    %26 = vector.shape_cast %25 : vector<1x4x128xf32> to vector<4x128xf32>
    %cst_35 = arith.constant dense<0.000000e+00> : vector<16x128xf32>
    %27 = tpu.matmul %24, %26, %cst_35 {dimension_numbers = #tpu.dot_dimension_numbers<[1], [0], [0], [1], [0, 0, 1, 1], [], []>} : vector<16x4xf32>, vector<4x128xf32>, vector<16x128xf32> -> vector<16x128xf32>
    %28 = arith.addf %22, %27 : vector<16x128xf32>
    %c0_36 = arith.constant 0 : index
    %c4 = arith.constant 4 : index
    %c0_37 = arith.constant 0 : index
    %29 = vector.load %arg11[%c0_36, %c4, %c0_37] : memref<1x22x4xf32, #tpu.memory_space<vmem>>, vector<1x16x4xf32>
    %30 = vector.shape_cast %29 : vector<1x16x4xf32> to vector<16x4xf32>
    %c4_38 = arith.constant 4 : index
    %c0_39 = arith.constant 0 : index
    %c0_40 = arith.constant 0 : index
    %31 = vector.load %arg2[%c4_38, %c0_39, %c0_40] : memref<7x4x128xf32, #tpu.memory_space<vmem>>, vector<1x4x128xf32>
    %32 = vector.shape_cast %31 : vector<1x4x128xf32> to vector<4x128xf32>
    %cst_41 = arith.constant dense<0.000000e+00> : vector<16x128xf32>
    %33 = tpu.matmul %30, %32, %cst_41 {dimension_numbers = #tpu.dot_dimension_numbers<[1], [0], [0], [1], [0, 0, 1, 1], [], []>} : vector<16x4xf32>, vector<4x128xf32>, vector<16x128xf32> -> vector<16x128xf32>
    %34 = arith.addf %28, %33 : vector<16x128xf32>
    %c0_42 = arith.constant 0 : index
    %c5 = arith.constant 5 : index
    %c0_43 = arith.constant 0 : index
    %35 = vector.load %arg11[%c0_42, %c5, %c0_43] : memref<1x22x4xf32, #tpu.memory_space<vmem>>, vector<1x16x4xf32>
    %36 = vector.shape_cast %35 : vector<1x16x4xf32> to vector<16x4xf32>
    %c5_44 = arith.constant 5 : index
    %c0_45 = arith.constant 0 : index
    %c0_46 = arith.constant 0 : index
    %37 = vector.load %arg2[%c5_44, %c0_45, %c0_46] : memref<7x4x128xf32, #tpu.memory_space<vmem>>, vector<1x4x128xf32>
    %38 = vector.shape_cast %37 : vector<1x4x128xf32> to vector<4x128xf32>
    %cst_47 = arith.constant dense<0.000000e+00> : vector<16x128xf32>
    %39 = tpu.matmul %36, %38, %cst_47 {dimension_numbers = #tpu.dot_dimension_numbers<[1], [0], [0], [1], [0, 0, 1, 1], [], []>} : vector<16x4xf32>, vector<4x128xf32>, vector<16x128xf32> -> vector<16x128xf32>
    %40 = arith.addf %34, %39 : vector<16x128xf32>
    %c0_48 = arith.constant 0 : index
    %c6 = arith.constant 6 : index
    %c0_49 = arith.constant 0 : index
    %41 = vector.load %arg11[%c0_48, %c6, %c0_49] : memref<1x22x4xf32, #tpu.memory_space<vmem>>, vector<1x16x4xf32>
    %42 = vector.shape_cast %41 : vector<1x16x4xf32> to vector<16x4xf32>
    %c6_50 = arith.constant 6 : index
    %c0_51 = arith.constant 0 : index
    %c0_52 = arith.constant 0 : index
    %43 = vector.load %arg2[%c6_50, %c0_51, %c0_52] : memref<7x4x128xf32, #tpu.memory_space<vmem>>, vector<1x4x128xf32>
    %44 = vector.shape_cast %43 : vector<1x4x128xf32> to vector<4x128xf32>
    %cst_53 = arith.constant dense<0.000000e+00> : vector<16x128xf32>
    %45 = tpu.matmul %42, %44, %cst_53 {dimension_numbers = #tpu.dot_dimension_numbers<[1], [0], [0], [1], [0, 0, 1, 1], [], []>} : vector<16x4xf32>, vector<4x128xf32>, vector<16x128xf32> -> vector<16x128xf32>
    %46 = arith.addf %40, %45 : vector<16x128xf32>
    %c0_54 = arith.constant 0 : index
    %c0_55 = arith.constant 0 : index
    %47 = vector.load %arg3[%c0_54, %c0_55] : memref<2x128xf32, #tpu.memory_space<vmem>>, vector<1x128xf32>
    %48 = vector.broadcast %47 : vector<1x128xf32> to vector<16x128xf32>
    %49 = arith.mulf %46, %48 : vector<16x128xf32>
    %c1_56 = arith.constant 1 : index
    %c0_57 = arith.constant 0 : index
    %50 = vector.load %arg3[%c1_56, %c0_57] : memref<2x128xf32, #tpu.memory_space<vmem>>, vector<1x128xf32>
    %51 = vector.broadcast %50 : vector<1x128xf32> to vector<16x128xf32>
    %52 = arith.addf %49, %51 : vector<16x128xf32>
    %cst_58 = arith.constant 0.000000e+00 : f32
    %53 = vector.broadcast %cst_58 : f32 to vector<16x128xf32>
    %54 = arith.maximumf %52, %53 : vector<16x128xf32>
    %55 = vector.shape_cast %54 : vector<16x128xf32> to vector<1x16x128xf32>
    %cst_59 = arith.constant 0.000000e+00 : f32
    %56 = vector.broadcast %cst_59 : f32 to vector<1x2x128xf32>
    %c0_60 = arith.constant 0 : index
    %c0_61 = arith.constant 0 : index
    %c0_62 = arith.constant 0 : index
    %57 = vector.load %arg12[%c0_60, %c0_61, %c0_62] : memref<1x20x128xf32, #tpu.memory_space<vmem>>, vector<1x2x128xf32>
    tpu.vector_store %arg12[%c0_60, %c0_61, %c0_62], %56 {strides = array<i32>} : memref<1x20x128xf32, #tpu.memory_space<vmem>>, vector<1x2x128xf32>,
    %cst_63 = arith.constant 0.000000e+00 : f32
    %58 = vector.broadcast %cst_63 : f32 to vector<1x2x128xf32>
    %c0_64 = arith.constant 0 : index
    %c18 = arith.constant 18 : index
    %c0_65 = arith.constant 0 : index
    %59 = vector.load %arg12[%c0_64, %c18, %c0_65] : memref<1x20x128xf32, #tpu.memory_space<vmem>>, vector<1x2x128xf32>
    tpu.vector_store %arg12[%c0_64, %c18, %c0_65], %58 {strides = array<i32>} : memref<1x20x128xf32, #tpu.memory_space<vmem>>, vector<1x2x128xf32>,
    %c0_66 = arith.constant 0 : index
    %c2_67 = arith.constant 2 : index
    %c0_68 = arith.constant 0 : index
    %60 = vector.load %arg12[%c0_66, %c2_67, %c0_68] : memref<1x20x128xf32, #tpu.memory_space<vmem>>, vector<1x16x128xf32>
    tpu.vector_store %arg12[%c0_66, %c2_67, %c0_68], %55 {strides = array<i32>} : memref<1x20x128xf32, #tpu.memory_space<vmem>>, vector<1x16x128xf32>,
    %c0_69 = arith.constant 0 : index
    %c0_70 = arith.constant 0 : index
    %c0_71 = arith.constant 0 : index
    %61 = vector.load %arg12[%c0_69, %c0_70, %c0_71] : memref<1x20x128xf32, #tpu.memory_space<vmem>>, vector<1x16x128xf32>
    %62 = vector.shape_cast %61 : vector<1x16x128xf32> to vector<16x128xf32>
    %c0_72 = arith.constant 0 : index
    %c0_73 = arith.constant 0 : index
    %c0_74 = arith.constant 0 : index
    %63 = vector.load %arg4[%c0_72, %c0_73, %c0_74] : memref<5x128x256xf32, #tpu.memory_space<vmem>>, vector<1x128x256xf32>
    %64 = vector.shape_cast %63 : vector<1x128x256xf32> to vector<128x256xf32>
    %cst_75 = arith.constant dense<0.000000e+00> : vector<16x256xf32>
    %65 = tpu.matmul %62, %64, %cst_75 {dimension_numbers = #tpu.dot_dimension_numbers<[1], [0], [0], [1], [0, 0, 1, 1], [], []>} : vector<16x128xf32>, vector<128x256xf32>, vector<16x256xf32> -> vector<16x256xf32>
    %c0_76 = arith.constant 0 : index
    %c1_77 = arith.constant 1 : index
    %c0_78 = arith.constant 0 : index
    %66 = vector.load %arg12[%c0_76, %c1_77, %c0_78] : memref<1x20x128xf32, #tpu.memory_space<vmem>>, vector<1x16x128xf32>
    %67 = vector.shape_cast %66 : vector<1x16x128xf32> to vector<16x128xf32>
    %c1_79 = arith.constant 1 : index
    %c0_80 = arith.constant 0 : index
    %c0_81 = arith.constant 0 : index
    %68 = vector.load %arg4[%c1_79, %c0_80, %c0_81] : memref<5x128x256xf32, #tpu.memory_space<vmem>>, vector<1x128x256xf32>
    %69 = vector.shape_cast %68 : vector<1x128x256xf32> to vector<128x256xf32>
    %cst_82 = arith.constant dense<0.000000e+00> : vector<16x256xf32>
    %70 = tpu.matmul %67, %69, %cst_82 {dimension_numbers = #tpu.dot_dimension_numbers<[1], [0], [0], [1], [0, 0, 1, 1], [], []>} : vector<16x128xf32>, vector<128x256xf32>, vector<16x256xf32> -> vector<16x256xf32>
    %71 = arith.addf %65, %70 : vector<16x256xf32>
    %c0_83 = arith.constant 0 : index
    %c2_84 = arith.constant 2 : index
    %c0_85 = arith.constant 0 : index
    %72 = vector.load %arg12[%c0_83, %c2_84, %c0_85] : memref<1x20x128xf32, #tpu.memory_space<vmem>>, vector<1x16x128xf32>
    %73 = vector.shape_cast %72 : vector<1x16x128xf32> to vector<16x128xf32>
    %c2_86 = arith.constant 2 : index
    %c0_87 = arith.constant 0 : index
    %c0_88 = arith.constant 0 : index
    %74 = vector.load %arg4[%c2_86, %c0_87, %c0_88] : memref<5x128x256xf32, #tpu.memory_space<vmem>>, vector<1x128x256xf32>
    %75 = vector.shape_cast %74 : vector<1x128x256xf32> to vector<128x256xf32>
    %cst_89 = arith.constant dense<0.000000e+00> : vector<16x256xf32>
    %76 = tpu.matmul %73, %75, %cst_89 {dimension_numbers = #tpu.dot_dimension_numbers<[1], [0], [0], [1], [0, 0, 1, 1], [], []>} : vector<16x128xf32>, vector<128x256xf32>, vector<16x256xf32> -> vector<16x256xf32>
    %77 = arith.addf %71, %76 : vector<16x256xf32>
    %c0_90 = arith.constant 0 : index
    %c3_91 = arith.constant 3 : index
    %c0_92 = arith.constant 0 : index
    %78 = vector.load %arg12[%c0_90, %c3_91, %c0_92] : memref<1x20x128xf32, #tpu.memory_space<vmem>>, vector<1x16x128xf32>
    %79 = vector.shape_cast %78 : vector<1x16x128xf32> to vector<16x128xf32>
    %c3_93 = arith.constant 3 : index
    %c0_94 = arith.constant 0 : index
    %c0_95 = arith.constant 0 : index
    %80 = vector.load %arg4[%c3_93, %c0_94, %c0_95] : memref<5x128x256xf32, #tpu.memory_space<vmem>>, vector<1x128x256xf32>
    %81 = vector.shape_cast %80 : vector<1x128x256xf32> to vector<128x256xf32>
    %cst_96 = arith.constant dense<0.000000e+00> : vector<16x256xf32>
    %82 = tpu.matmul %79, %81, %cst_96 {dimension_numbers = #tpu.dot_dimension_numbers<[1], [0], [0], [1], [0, 0, 1, 1], [], []>} : vector<16x128xf32>, vector<128x256xf32>, vector<16x256xf32> -> vector<16x256xf32>
    %83 = arith.addf %77, %82 : vector<16x256xf32>
    %c0_97 = arith.constant 0 : index
    %c4_98 = arith.constant 4 : index
    %c0_99 = arith.constant 0 : index
    %84 = vector.load %arg12[%c0_97, %c4_98, %c0_99] : memref<1x20x128xf32, #tpu.memory_space<vmem>>, vector<1x16x128xf32>
    %85 = vector.shape_cast %84 : vector<1x16x128xf32> to vector<16x128xf32>
    %c4_100 = arith.constant 4 : index
    %c0_101 = arith.constant 0 : index
    %c0_102 = arith.constant 0 : index
    %86 = vector.load %arg4[%c4_100, %c0_101, %c0_102] : memref<5x128x256xf32, #tpu.memory_space<vmem>>, vector<1x128x256xf32>
    %87 = vector.shape_cast %86 : vector<1x128x256xf32> to vector<128x256xf32>
    %cst_103 = arith.constant dense<0.000000e+00> : vector<16x256xf32>
    %88 = tpu.matmul %85, %87, %cst_103 {dimension_numbers = #tpu.dot_dimension_numbers<[1], [0], [0], [1], [0, 0, 1, 1], [], []>} : vector<16x128xf32>, vector<128x256xf32>, vector<16x256xf32> -> vector<16x256xf32>
    %89 = arith.addf %83, %88 : vector<16x256xf32>
    %c0_104 = arith.constant 0 : index
    %c0_105 = arith.constant 0 : index
    %90 = vector.load %arg5[%c0_104, %c0_105] : memref<2x256xf32, #tpu.memory_space<vmem>>, vector<1x256xf32>
    %91 = vector.broadcast %90 : vector<1x256xf32> to vector<16x256xf32>
    %92 = arith.mulf %89, %91 : vector<16x256xf32>
    %c1_106 = arith.constant 1 : index
    %c0_107 = arith.constant 0 : index
    %93 = vector.load %arg5[%c1_106, %c0_107] : memref<2x256xf32, #tpu.memory_space<vmem>>, vector<1x256xf32>
    %94 = vector.broadcast %93 : vector<1x256xf32> to vector<16x256xf32>
    %95 = arith.addf %92, %94 : vector<16x256xf32>
    %cst_108 = arith.constant 0.000000e+00 : f32
    %96 = vector.broadcast %cst_108 : f32 to vector<16x256xf32>
    %97 = arith.maximumf %95, %96 : vector<16x256xf32>
    %98 = vector.shape_cast %97 : vector<16x256xf32> to vector<1x16x256xf32>
    %cst_109 = arith.constant 0.000000e+00 : f32
    %99 = vector.broadcast %cst_109 : f32 to vector<1x1x256xf32>
    %c0_110 = arith.constant 0 : index
    %c0_111 = arith.constant 0 : index
    %c0_112 = arith.constant 0 : index
    %100 = vector.load %arg13[%c0_110, %c0_111, %c0_112] : memref<1x18x256xf32, #tpu.memory_space<vmem>>, vector<1x1x256xf32>
    tpu.vector_store %arg13[%c0_110, %c0_111, %c0_112], %99 {strides = array<i32>} : memref<1x18x256xf32, #tpu.memory_space<vmem>>, vector<1x1x256xf32>,
    %cst_113 = arith.constant 0.000000e+00 : f32
    %101 = vector.broadcast %cst_113 : f32 to vector<1x1x256xf32>
    %c0_114 = arith.constant 0 : index
    %c17 = arith.constant 17 : index
    %c0_115 = arith.constant 0 : index
    %102 = vector.load %arg13[%c0_114, %c17, %c0_115] : memref<1x18x256xf32, #tpu.memory_space<vmem>>, vector<1x1x256xf32>
    tpu.vector_store %arg13[%c0_114, %c17, %c0_115], %101 {strides = array<i32>} : memref<1x18x256xf32, #tpu.memory_space<vmem>>, vector<1x1x256xf32>,
    %c0_116 = arith.constant 0 : index
    %c1_117 = arith.constant 1 : index
    %c0_118 = arith.constant 0 : index
    %103 = vector.load %arg13[%c0_116, %c1_117, %c0_118] : memref<1x18x256xf32, #tpu.memory_space<vmem>>, vector<1x16x256xf32>
    tpu.vector_store %arg13[%c0_116, %c1_117, %c0_118], %98 {strides = array<i32>} : memref<1x18x256xf32, #tpu.memory_space<vmem>>, vector<1x16x256xf32>,
    %c0_119 = arith.constant 0 : index
    %c0_120 = arith.constant 0 : index
    %c0_121 = arith.constant 0 : index
    %104 = vector.load %arg13[%c0_119, %c0_120, %c0_121] : memref<1x18x256xf32, #tpu.memory_space<vmem>>, vector<1x16x256xf32>
    %105 = vector.shape_cast %104 : vector<1x16x256xf32> to vector<16x256xf32>
    %c0_122 = arith.constant 0 : index
    %c0_123 = arith.constant 0 : index
    %c0_124 = arith.constant 0 : index
    %106 = vector.load %arg6[%c0_122, %c0_123, %c0_124] : memref<3x256x128xf32, #tpu.memory_space<vmem>>, vector<1x256x128xf32>
    %107 = vector.shape_cast %106 : vector<1x256x128xf32> to vector<256x128xf32>
    %cst_125 = arith.constant dense<0.000000e+00> : vector<16x128xf32>
    %108 = tpu.matmul %105, %107, %cst_125 {dimension_numbers = #tpu.dot_dimension_numbers<[1], [0], [0], [1], [0, 0, 1, 1], [], []>} : vector<16x256xf32>, vector<256x128xf32>, vector<16x128xf32> -> vector<16x128xf32>
    %c0_126 = arith.constant 0 : index
    %c1_127 = arith.constant 1 : index
    %c0_128 = arith.constant 0 : index
    %109 = vector.load %arg13[%c0_126, %c1_127, %c0_128] : memref<1x18x256xf32, #tpu.memory_space<vmem>>, vector<1x16x256xf32>
    %110 = vector.shape_cast %109 : vector<1x16x256xf32> to vector<16x256xf32>
    %c1_129 = arith.constant 1 : index
    %c0_130 = arith.constant 0 : index
    %c0_131 = arith.constant 0 : index
    %111 = vector.load %arg6[%c1_129, %c0_130, %c0_131] : memref<3x256x128xf32, #tpu.memory_space<vmem>>, vector<1x256x128xf32>
    %112 = vector.shape_cast %111 : vector<1x256x128xf32> to vector<256x128xf32>
    %cst_132 = arith.constant dense<0.000000e+00> : vector<16x128xf32>
    %113 = tpu.matmul %110, %112, %cst_132 {dimension_numbers = #tpu.dot_dimension_numbers<[1], [0], [0], [1], [0, 0, 1, 1], [], []>} : vector<16x256xf32>, vector<256x128xf32>, vector<16x128xf32> -> vector<16x128xf32>
    %114 = arith.addf %108, %113 : vector<16x128xf32>
    %c0_133 = arith.constant 0 : index
    %c2_134 = arith.constant 2 : index
    %c0_135 = arith.constant 0 : index
    %115 = vector.load %arg13[%c0_133, %c2_134, %c0_135] : memref<1x18x256xf32, #tpu.memory_space<vmem>>, vector<1x16x256xf32>
    %116 = vector.shape_cast %115 : vector<1x16x256xf32> to vector<16x256xf32>
    %c2_136 = arith.constant 2 : index
    %c0_137 = arith.constant 0 : index
    %c0_138 = arith.constant 0 : index
    %117 = vector.load %arg6[%c2_136, %c0_137, %c0_138] : memref<3x256x128xf32, #tpu.memory_space<vmem>>, vector<1x256x128xf32>
    %118 = vector.shape_cast %117 : vector<1x256x128xf32> to vector<256x128xf32>
    %cst_139 = arith.constant dense<0.000000e+00> : vector<16x128xf32>
    %119 = tpu.matmul %116, %118, %cst_139 {dimension_numbers = #tpu.dot_dimension_numbers<[1], [0], [0], [1], [0, 0, 1, 1], [], []>} : vector<16x256xf32>, vector<256x128xf32>, vector<16x128xf32> -> vector<16x128xf32>
    %120 = arith.addf %114, %119 : vector<16x128xf32>
    %c0_140 = arith.constant 0 : index
    %c0_141 = arith.constant 0 : index
    %121 = vector.load %arg7[%c0_140, %c0_141] : memref<2x128xf32, #tpu.memory_space<vmem>>, vector<1x128xf32>
    %122 = vector.broadcast %121 : vector<1x128xf32> to vector<16x128xf32>
    %123 = arith.mulf %120, %122 : vector<16x128xf32>
    %c1_142 = arith.constant 1 : index
    %c0_143 = arith.constant 0 : index
    %124 = vector.load %arg7[%c1_142, %c0_143] : memref<2x128xf32, #tpu.memory_space<vmem>>, vector<1x128xf32>
    %125 = vector.broadcast %124 : vector<1x128xf32> to vector<16x128xf32>
    %126 = arith.addf %123, %125 : vector<16x128xf32>
    %cst_144 = arith.constant 0.000000e+00 : f32
    %127 = vector.broadcast %cst_144 : f32 to vector<16x128xf32>
    %128 = arith.maximumf %126, %127 : vector<16x128xf32>
    %129 = vector.shape_cast %128 : vector<16x128xf32> to vector<1x16x128xf32>
    %cst_145 = arith.constant dense<0.000000e+00> : vector<1x128xf32>
    %130 = vector.multi_reduction <add>, %129, %cst_145 [1] : vector<1x16x128xf32> to vector<1x128xf32>
    %cst_146 = arith.constant 1.600000e+01 : f32
    %131 = vector.broadcast %cst_146 : f32 to vector<1x128xf32>
    %132 = arith.divf %130, %131 : vector<1x128xf32>
    %c0_147 = arith.constant 0 : index
    %c0_148 = arith.constant 0 : index
    %133 = vector.load %arg8[%c0_147, %c0_148] : memref<128x1xf32, #tpu.memory_space<vmem>>, vector<128x1xf32>
    %cst_149 = arith.constant dense<0.000000e+00> : vector<1x1xf32>
    %134 = tpu.matmul %132, %133, %cst_149 {dimension_numbers = #tpu.dot_dimension_numbers<[1], [0], [0], [1], [0, 0, 1, 1], [], []>} : vector<1x128xf32>, vector<128x1xf32>, vector<1x1xf32> -> vector<1x1xf32>
    %c0_150 = arith.constant 0 : index
    %c0_151 = arith.constant 0 : index
    %135 = vector.load %arg9[%c0_150, %c0_151] : memref<1x1xf32, #tpu.memory_space<vmem>>, vector<1x1xf32>
    %136 = arith.addf %134, %135 : vector<1x1xf32>
    %137 = vector.shape_cast %136 : vector<1x1xf32> to vector<1x1x1xf32>
    %c0_152 = arith.constant 0 : index
    %c0_153 = arith.constant 0 : index
    %c0_154 = arith.constant 0 : index
    %138 = vector.load %arg10[%c0_152, %c0_153, %c0_154] : memref<1x1x1xf32, #tpu.memory_space<vmem>>, vector<1x1x1xf32>
    tpu.vector_store %arg10[%c0_152, %c0_153, %c0_154], %137 {strides = array<i32>} : memref<1x1x1xf32, #tpu.memory_space<vmem>>, vector<1x1x1xf32>,
    return
  }
  func.func @transform_0(%arg0: i32) -> (i32, i32, i32) {
    %c0_i32 = arith.constant 0 : i32
    %c0_i32_0 = arith.constant 0 : i32
    %c0_i32_1 = arith.constant 0 : i32
    return %arg0, %c0_i32, %c0_i32_0 : i32, i32, i32
  }
  func.func @transform_1(%arg0: i32) -> (i32, i32, i32) {
    %c0_i32 = arith.constant 0 : i32
    %c0_i32_0 = arith.constant 0 : i32
    %c0_i32_1 = arith.constant 0 : i32
    %c0_i32_2 = arith.constant 0 : i32
    return %c0_i32, %c0_i32_0, %c0_i32_1 : i32, i32, i32
  }
  func.func @transform_2(%arg0: i32) -> (i32, i32) {
    %c0_i32 = arith.constant 0 : i32
    %c0_i32_0 = arith.constant 0 : i32
    %c0_i32_1 = arith.constant 0 : i32
    return %c0_i32, %c0_i32_0 : i32, i32
  }
  func.func @transform_3(%arg0: i32) -> (i32, i32, i32) {
    %c0_i32 = arith.constant 0 : i32
    %c0_i32_0 = arith.constant 0 : i32
    %c0_i32_1 = arith.constant 0 : i32
    %c0_i32_2 = arith.constant 0 : i32
    return %c0_i32, %c0_i32_0, %c0_i32_1 : i32, i32, i32
  }
  func.func @transform_4(%arg0: i32) -> (i32, i32) {
    %c0_i32 = arith.constant 0 : i32
    %c0_i32_0 = arith.constant 0 : i32
    %c0_i32_1 = arith.constant 0 : i32
    return %c0_i32, %c0_i32_0 : i32, i32
  }
  func.func @transform_5(%arg0: i32) -> (i32, i32, i32) {
    %c0_i32 = arith.constant 0 : i32
    %c0_i32_0 = arith.constant 0 : i32
    %c0_i32_1 = arith.constant 0 : i32
    %c0_i32_2 = arith.constant 0 : i32
    return %c0_i32, %c0_i32_0, %c0_i32_1 : i32, i32, i32
  }
  func.func @transform_6(%arg0: i32) -> (i32, i32) {
    %c0_i32 = arith.constant 0 : i32
    %c0_i32_0 = arith.constant 0 : i32
    %c0_i32_1 = arith.constant 0 : i32
    return %c0_i32, %c0_i32_0 : i32, i32
  }
  func.func @transform_7(%arg0: i32) -> (i32, i32) {
    %c0_i32 = arith.constant 0 : i32
    %c0_i32_0 = arith.constant 0 : i32
    %c0_i32_1 = arith.constant 0 : i32
    return %c0_i32, %c0_i32_0 : i32, i32
  }
  func.func @transform_8(%arg0: i32) -> (i32, i32) {
    %c0_i32 = arith.constant 0 : i32
    %c0_i32_0 = arith.constant 0 : i32
    %c0_i32_1 = arith.constant 0 : i32
    return %c0_i32, %c0_i32_0 : i32, i32
  }
  func.func @transform_9(%arg0: i32) -> (i32, i32, i32) {
    %c0_i32 = arith.constant 0 : i32
    %c0_i32_0 = arith.constant 0 : i32
    %c0_i32_1 = arith.constant 0 : i32
    return %arg0, %c0_i32, %c0_i32_0 : i32, i32, i32
  }
}

</mosaic_0001>

<llo_original>
// kernel: tpu_custom_call.1
$region0: #{tpu_custom_call.1}
  #allocation0 [shape = 'u32[]', space=smem, size = 0x4, offset = 0x4, fixed_abs, tag = 'smem constant byte address 0x4 - core index']
  #allocation1 [shape = 'u32[144,128]{1,0:T(1,128)}', space=vmem, size = 0x12000, scoped, tag = 'internal scratch']
  #allocation2 [shape = 'f32[1,22,4]{2,1,0:T(8,128)}', space=vmem, size = 0x3000, scoped, tag = 'scratch operand']
  #allocation3 [shape = 'f32[1,20,128]{2,1,0:T(8,128)}', space=vmem, size = 0x3000, scoped, tag = 'scratch operand']
  #allocation4 [shape = 'f32[1,18,256]{2,1,0:T(8,128)}', space=vmem, size = 0x6000, scoped, tag = 'scratch operand']
  #allocation5 [shape = 'f32[1,1]{1,0:T(1,128)S(1)}', space=vmem, size = 0x200, scoped, tag = 'scoped memory for tpu_custom_call.1']
  %s0 = inlined_call_operand.vmem [shape: f32[2,16,4], index: 0, kind: input, shape index: {}]
  %s1 = inlined_call_operand.vmem [shape: f32[7,4,128], index: 1, kind: input, shape index: {}]
  %s2 = inlined_call_operand.vmem [shape: f32[2,128], index: 2, kind: input, shape index: {}]
  %s3 = inlined_call_operand.hbm [shape: f32[5,128,256], index: 3, kind: input, shape index: {}]
  %s4 = inlined_call_operand.vmem [shape: f32[2,256], index: 4, kind: input, shape index: {}]
  %s5 = inlined_call_operand.hbm [shape: f32[3,256,128], index: 5, kind: input, shape index: {}]
  %s6 = inlined_call_operand.vmem [shape: f32[2,128], index: 6, kind: input, shape index: {}]
  %s7 = inlined_call_operand.vmem [shape: f32[128,1], index: 7, kind: input, shape index: {}]
  %s8 = inlined_call_operand.<no memory space> [shape: f32[1,1], index: 8, kind: input, shape index: {}]
  %s9 = inlined_call_operand.vmem [shape: f32[2,1,1], index: 9, kind: output, shape index: {}]
  %s10 = sld [smem:[#allocation0]]
  $region77: #{tpu_custom_call.1} parent=0
    _
  %s12 = ssub.s32 1, %s10
  %s13 = scalar_select 0, %s12, %s10
  %v14 = vstv %s8
  %15 = vst [vmem:[#allocation5] sm:$0x1] %v14
  $region1: #{tpu_custom_call.1} parent=0
    #allocation6 [shape = 'u8[655360]{0}', space=vmem, size = 0xa0000, scoped, tag = 'input window, operand 3, single buffered']
    #allocation7 [shape = 's32[2]{0}', space=sflag, size = 0x8, scoped, tag = 'scoped memory for tpu_custom_call.1']
    #allocation8 [shape = 'u8[393216]{0}', space=vmem, size = 0x60000, scoped, tag = 'input window, operand 5, single buffered']
    #allocation9 [shape = 's32[1]{0}', space=sflag, size = 0x4, scoped, tag = 'scoped memory for tpu_custom_call.1']
    %16 = vsyncpa [#allocation7], 0
    %17 = vsyncpa [#allocation9], 0
    loop: start=0, step=1, limit=4
    $region2: #{tpu_custom_call.1} parent=1 // loop_pre_header
      _
    $region3: #{tpu_custom_call.1} parent=1 // loop_header
      %s19 = sphi 0, %s23
      %p20 = scmp.ge.s32.totalorder %s19, 4
      %s29 = sphi 0, %s31
      %s32 = sphi 0, %s29
      %s33 = sphi 0, %s32
      %s49 = sphi 0, %s33
      %s53 = sphi 0, %s53
      %s55 = sphi 0, %s53
      %s56 = sphi 0, %s55
      %s70 = sphi 0, %s56
      %s74 = sphi 0, %s74
      %s76 = sphi 0, %s74
      %s77 = sphi 0, %s76
      %s91 = sphi 0, %s77
      %s95 = sphi 0, %s95
      %s97 = sphi 0, %s95
      %s98 = sphi 0, %s97
      %s112 = sphi 0, %s98
      %s116 = sphi 0, %s116
      %s118 = sphi 0, %s116
      %s119 = sphi 0, %s118
      %s133 = sphi 0, %s119
      %s137 = sphi 0, %s137
      %s139 = sphi 0, %s137
      %s140 = sphi 0, %s139
      %s154 = sphi 0, %s140
      %s158 = sphi 0, %s158
      %s160 = sphi 0, %s158
      %s161 = sphi 0, %s160
      %s175 = sphi 0, %s161
      %s179 = sphi 0, %s179
      %s181 = sphi 0, %s179
      %s182 = sphi 0, %s181
      %s196 = sphi 0, %s182
      %s200 = sphi 0, %s200
      %s202 = sphi 0, %s200
      %s203 = sphi 0, %s202
      %s217 = sphi 0, %s203
      %s223 = sphi 0, %s225
      %s226 = sphi 0, %s223
      %s227 = sphi 0, %s226
      %s243 = sphi 0, %s227
    $region4: #{tpu_custom_call.1} parent=1 // loop_header_branch
      %22 = sbr.rel (%p20) target = $region8
    $region5: #{tpu_custom_call.1} parent=1 // loop_body
      %s24 = ssub.s32 %s19, 1
      %s25 = ssub.s32 %s19, 2
      %s26 = sadd.s32 %s19, 1
      %s27 = ssub.s32 %s19, %s26
      %p28 = scmp.eq.s32.totalorder %s27, 0
      %s30 = sadd.s32 %s29, 1
      %s31 = scalar_select %p28, %s29, %s30
      %p34 = pneg %p28
      %p35 = scmp.eq.s32.totalorder %s19, 1
      %p36 = por %p34, %p35
      %p37 = scmp.ne.s32.totalorder %s29, %s32
      %p38 = scmp.eq.s32.totalorder %s19, 0
      %p39 = por %p37, %p38
      %p40 = scmp.ne.s32.totalorder %s29, %s32
      %p41 = scmp.eq.s32.totalorder %s24, 1
      %p42 = por %p40, %p41
      %p43 = scmp.ne.s32.totalorder %s32, %s33
      %p44 = scmp.eq.s32.totalorder %s24, 0
      %p45 = por %p43, %p44
      %p46 = scmp.ne.s32.totalorder %s32, %s33
      %p47 = scmp.eq.s32.totalorder %s25, 1
      %p48 = por %p46, %p47
      %p50 = scmp.ne.s32.totalorder %s33, %s49
      %p51 = scmp.eq.s32.totalorder %s25, 0
      %p52 = por %p50, %p51
      %s54 = sadd.s32 %s53, 1
      %p57 = scmp.eq.s32.totalorder %s19, 1
      %p58 = scmp.ne.s32.totalorder %s53, %s55
      %p59 = scmp.eq.s32.totalorder %s19, 0
      %p60 = por %p58, %p59
      %p61 = scmp.ne.s32.totalorder %s53, %s55
      %p62 = scmp.eq.s32.totalorder %s24, 1
      %p63 = por %p61, %p62
      %p64 = scmp.ne.s32.totalorder %s55, %s56
      %p65 = scmp.eq.s32.totalorder %s24, 0
      %p66 = por %p64, %p65
      %p67 = scmp.ne.s32.totalorder %s55, %s56
      %p68 = scmp.eq.s32.totalorder %s25, 1
      %p69 = por %p67, %p68
      %p71 = scmp.ne.s32.totalorder %s56, %s70
      %p72 = scmp.eq.s32.totalorder %s25, 0
      %p73 = por %p71, %p72
      %s75 = sadd.s32 %s74, 1
      %p78 = scmp.eq.s32.totalorder %s19, 1
      %p79 = scmp.ne.s32.totalorder %s74, %s76
      %p80 = scmp.eq.s32.totalorder %s19, 0
      %p81 = por %p79, %p80
      %p82 = scmp.ne.s32.totalorder %s74, %s76
      %p83 = scmp.eq.s32.totalorder %s24, 1
      %p84 = por %p82, %p83
      %p85 = scmp.ne.s32.totalorder %s76, %s77
      %p86 = scmp.eq.s32.totalorder %s24, 0
      %p87 = por %p85, %p86
      %p88 = scmp.ne.s32.totalorder %s76, %s77
      %p89 = scmp.eq.s32.totalorder %s25, 1
      %p90 = por %p88, %p89
      %p92 = scmp.ne.s32.totalorder %s77, %s91
      %p93 = scmp.eq.s32.totalorder %s25, 0
      %p94 = por %p92, %p93
      %s96 = sadd.s32 %s95, 1
      %p99 = scmp.eq.s32.totalorder %s19, 1
      %p100 = scmp.ne.s32.totalorder %s95, %s97
      %p101 = scmp.eq.s32.totalorder %s19, 0
      %p102 = por %p100, %p101
      %p103 = scmp.ne.s32.totalorder %s95, %s97
      %p104 = scmp.eq.s32.totalorder %s24, 1
      %p105 = por %p103, %p104
      %p106 = scmp.ne.s32.totalorder %s97, %s98
      %p107 = scmp.eq.s32.totalorder %s24, 0
      %p108 = por %p106, %p107
      %p109 = scmp.ne.s32.totalorder %s97, %s98
      %p110 = scmp.eq.s32.totalorder %s25, 1
      %p111 = por %p109, %p110
      %p113 = scmp.ne.s32.totalorder %s98, %s112
      %p114 = scmp.eq.s32.totalorder %s25, 0
      %p115 = por %p113, %p114
      %s117 = sadd.s32 %s116, 1
      %p120 = scmp.eq.s32.totalorder %s19, 1
      %p121 = scmp.ne.s32.totalorder %s116, %s118
      %p122 = scmp.eq.s32.totalorder %s19, 0
      %p123 = por %p121, %p122
      %p124 = scmp.ne.s32.totalorder %s116, %s118
      %p125 = scmp.eq.s32.totalorder %s24, 1
      %p126 = por %p124, %p125
      %p127 = scmp.ne.s32.totalorder %s118, %s119
      %p128 = scmp.eq.s32.totalorder %s24, 0
      %p129 = por %p127, %p128
      %p130 = scmp.ne.s32.totalorder %s118, %s119
      %p131 = scmp.eq.s32.totalorder %s25, 1
      %p132 = por %p130, %p131
      %p134 = scmp.ne.s32.totalorder %s119, %s133
      %p135 = scmp.eq.s32.totalorder %s25, 0
      %p136 = por %p134, %p135
      %s138 = sadd.s32 %s137, 1
      %p141 = scmp.eq.s32.totalorder %s19, 1
      %p142 = scmp.ne.s32.totalorder %s137, %s139
      %p143 = scmp.eq.s32.totalorder %s19, 0
      %p144 = por %p142, %p143
      %p145 = scmp.ne.s32.totalorder %s137, %s139
      %p146 = scmp.eq.s32.totalorder %s24, 1
      %p147 = por %p145, %p146
      %p148 = scmp.ne.s32.totalorder %s139, %s140
      %p149 = scmp.eq.s32.totalorder %s24, 0
      %p150 = por %p148, %p149
      %p151 = scmp.ne.s32.totalorder %s139, %s140
      %p152 = scmp.eq.s32.totalorder %s25, 1
      %p153 = por %p151, %p152
      %p155 = scmp.ne.s32.totalorder %s140, %s154
      %p156 = scmp.eq.s32.totalorder %s25, 0
      %p157 = por %p155, %p156
      %s159 = sadd.s32 %s158, 1
      %p162 = scmp.eq.s32.totalorder %s19, 1
      %p163 = scmp.ne.s32.totalorder %s158, %s160
      %p164 = scmp.eq.s32.totalorder %s19, 0
      %p165 = por %p163, %p164
      %p166 = scmp.ne.s32.totalorder %s158, %s160
      %p167 = scmp.eq.s32.totalorder %s24, 1
      %p168 = por %p166, %p167
      %p169 = scmp.ne.s32.totalorder %s160, %s161
      %p170 = scmp.eq.s32.totalorder %s24, 0
      %p171 = por %p169, %p170
      %p172 = scmp.ne.s32.totalorder %s160, %s161
      %p173 = scmp.eq.s32.totalorder %s25, 1
      %p174 = por %p172, %p173
      %p176 = scmp.ne.s32.totalorder %s161, %s175
      %p177 = scmp.eq.s32.totalorder %s25, 0
      %p178 = por %p176, %p177
      %s180 = sadd.s32 %s179, 1
      %p183 = scmp.eq.s32.totalorder %s19, 1
      %p184 = scmp.ne.s32.totalorder %s179, %s181
      %p185 = scmp.eq.s32.totalorder %s19, 0
      %p186 = por %p184, %p185
      %p187 = scmp.ne.s32.totalorder %s179, %s181
      %p188 = scmp.eq.s32.totalorder %s24, 1
      %p189 = por %p187, %p188
      %p190 = scmp.ne.s32.totalorder %s181, %s182
      %p191 = scmp.eq.s32.totalorder %s24, 0
      %p192 = por %p190, %p191
      %p193 = scmp.ne.s32.totalorder %s181, %s182
      %p194 = scmp.eq.s32.totalorder %s25, 1
      %p195 = por %p193, %p194
      %p197 = scmp.ne.s32.totalorder %s182, %s196
      %p198 = scmp.eq.s32.totalorder %s25, 0
      %p199 = por %p197, %p198
      %s201 = sadd.s32 %s200, 1
      %p204 = scmp.eq.s32.totalorder %s19, 1
      %p205 = scmp.ne.s32.totalorder %s200, %s202
      %p206 = scmp.eq.s32.totalorder %s19, 0
      %p207 = por %p205, %p206
      %p208 = scmp.ne.s32.totalorder %s200, %s202
      %p209 = scmp.eq.s32.totalorder %s24, 1
      %p210 = por %p208, %p209
      %p211 = scmp.ne.s32.totalorder %s202, %s203
      %p212 = scmp.eq.s32.totalorder %s24, 0
      %p213 = por %p211, %p212
      %p214 = scmp.ne.s32.totalorder %s202, %s203
      %p215 = scmp.eq.s32.totalorder %s25, 1
      %p216 = por %p214, %p215
      %p218 = scmp.ne.s32.totalorder %s203, %s217
      %p219 = scmp.eq.s32.totalorder %s25, 0
      %p220 = por %p218, %p219
      %s221 = ssub.s32 %s19, %s26
      %p222 = scmp.eq.s32.totalorder %s221, 0
      %s224 = sadd.s32 %s223, 1
      %s225 = scalar_select %p222, %s223, %s224
      %p228 = pneg %p222
      %p229 = scmp.eq.s32.totalorder %s19, 1
      %p230 = por %p228, %p229
      %p231 = scmp.ne.s32.totalorder %s223, %s226
      %p232 = scmp.eq.s32.totalorder %s19, 0
      %p233 = por %p231, %p232
      %p234 = scmp.ne.s32.totalorder %s223, %s226
      %p235 = scmp.eq.s32.totalorder %s24, 1
      %p236 = por %p234, %p235
      %p237 = scmp.ne.s32.totalorder %s226, %s227
      %p238 = scmp.eq.s32.totalorder %s24, 0
      %p239 = por %p237, %p238
      %p240 = scmp.ne.s32.totalorder %s226, %s227
      %p241 = scmp.eq.s32.totalorder %s25, 1
      %p242 = por %p240, %p241
      %p244 = scmp.ne.s32.totalorder %s227, %s243
      %p245 = scmp.eq.s32.totalorder %s25, 0
      %p246 = por %p244, %p245
      %p247 = scmp.le.s32.totalorder 1, %s19
      %p248 = scmp.lt.s32.totalorder %s19, 3
      %p249 = pnand %p247, %p248
      %p250 = pneg %p249
      // Predicated region
      $region9: #{tpu_custom_call.1} parent=5 // pred_check
        _
      $region10: #{tpu_custom_call.1} parent=5 // pred_check_branch
        %252 = sbr.rel (%p249) target = $region12
      $region11: #{tpu_custom_call.1} parent=5 // pred_region
        %s253 = ssub.s32 %s19, 1
        // Predicated region
        $region13: #{tpu_custom_call.1} parent=11 // pred_check
          %p254 = pneg %p66
        $region14: #{tpu_custom_call.1} parent=11 // pred_check_branch
          %256 = sbr.rel (%p254) target = $region16
        $region15: #{tpu_custom_call.1} parent=11 // pred_region
          _
        $region16: #{tpu_custom_call.1} parent=11 // pred_fallthru
          _
        // Predicated region
        $region17: #{tpu_custom_call.1} parent=11 // pred_check
          %p257 = pneg %p87
        $region18: #{tpu_custom_call.1} parent=11 // pred_check_branch
          %259 = sbr.rel (%p257) target = $region20
        $region19: #{tpu_custom_call.1} parent=11 // pred_region
          _
        $region20: #{tpu_custom_call.1} parent=11 // pred_fallthru
          _
        // Predicated region
        $region21: #{tpu_custom_call.1} parent=11 // pred_check
          %p260 = pneg %p108
        $region22: #{tpu_custom_call.1} parent=11 // pred_check_branch
          %262 = sbr.rel (%p260) target = $region24
        $region23: #{tpu_custom_call.1} parent=11 // pred_region
          %s264 = ssub.s32 20480, 20480
          %265 = vsyncadd [#allocation7], %s264
          %s266 = sshll.u32 [#allocation6], 4
          %s267 = int_to_ptr.vmem [resolvable:$true] %s266
          %272 = dma.hbm_to_vmem [thread:$0]  %s3, 20480, %s267, [#allocation7], 256, 256, 16
        $region24: #{tpu_custom_call.1} parent=11 // pred_fallthru
          _
        // Predicated region
        $region25: #{tpu_custom_call.1} parent=11 // pred_check
          %p273 = pneg %p129
        $region26: #{tpu_custom_call.1} parent=11 // pred_check_branch
          %275 = sbr.rel (%p273) target = $region28
        $region27: #{tpu_custom_call.1} parent=11 // pred_region
          _
        $region28: #{tpu_custom_call.1} parent=11 // pred_fallthru
          _
        // Predicated region
        $region29: #{tpu_custom_call.1} parent=11 // pred_check
          %p276 = pneg %p150
        $region30: #{tpu_custom_call.1} parent=11 // pred_check_branch
          %278 = sbr.rel (%p276) target = $region32
        $region31: #{tpu_custom_call.1} parent=11 // pred_region
          %s280 = ssub.s32 12288, 12288
          %281 = vsyncadd [#allocation9], %s280
          %s282 = sshll.u32 [#allocation8], 4
          %s283 = int_to_ptr.vmem [resolvable:$true] %s282
          %288 = dma.hbm_to_vmem [thread:$0]  %s5, 12288, %s283, [#allocation9], 128, 128, 8
        $region32: #{tpu_custom_call.1} parent=11 // pred_fallthru
          _
        // Predicated region
        $region33: #{tpu_custom_call.1} parent=11 // pred_check
          %p289 = pneg %p171
        $region34: #{tpu_custom_call.1} parent=11 // pred_check_branch
          %291 = sbr.rel (%p289) target = $region36
        $region35: #{tpu_custom_call.1} parent=11 // pred_region
          _
        $region36: #{tpu_custom_call.1} parent=11 // pred_fallthru
          _
        // Predicated region
        $region37: #{tpu_custom_call.1} parent=11 // pred_check
          %p292 = pneg %p192
        $region38: #{tpu_custom_call.1} parent=11 // pred_check_branch
          %294 = sbr.rel (%p292) target = $region40
        $region39: #{tpu_custom_call.1} parent=11 // pred_region
          _
        $region40: #{tpu_custom_call.1} parent=11 // pred_fallthru
          _
        // Predicated region
        $region41: #{tpu_custom_call.1} parent=11 // pred_check
          %p295 = pneg %p213
        $region42: #{tpu_custom_call.1} parent=11 // pred_check_branch
          %297 = sbr.rel (%p295) target = $region44
        $region43: #{tpu_custom_call.1} parent=11 // pred_region
          _
        $region44: #{tpu_custom_call.1} parent=11 // pred_fallthru
          _
      $region12: #{tpu_custom_call.1} parent=5 // pred_fallthru
        _
      %p298 = scmp.lt.s32.totalorder %s19, 2
      // Predicated region
      $region45: #{tpu_custom_call.1} parent=5 // pred_check
        %p299 = pneg %p298
      $region46: #{tpu_custom_call.1} parent=5 // pred_check_branch
        %301 = sbr.rel (%p299) target = $region48
      $region47: #{tpu_custom_call.1} parent=5 // pred_region
        // Predicated region
        $region49: #{tpu_custom_call.1} parent=47 // pred_check
          %p302 = pneg %p39
        $region50: #{tpu_custom_call.1} parent=47 // pred_check_branch
          %304 = sbr.rel (%p302) target = $region52
        $region51: #{tpu_custom_call.1} parent=47 // pred_region
          %p305 = scmp.lt.s32.totalorder %s19, 1
          %s306 = scalar_select %p305, %s19, 1
          %s307 = smul.addr %s306, 2
          %s308 = smul.addr %s307, 8
          %s309 = scalar_lea.vmem %s0, %s308
        $region52: #{tpu_custom_call.1} parent=47 // pred_fallthru
          _
      $region48: #{tpu_custom_call.1} parent=5 // pred_fallthru
        _
      %p310 = scmp.le.s32.totalorder 1, %s19
      %p311 = scmp.lt.s32.totalorder %s19, 3
      %p312 = pnand %p310, %p311
      %p313 = pneg %p312
      // Predicated region
      $region53: #{tpu_custom_call.1} parent=5 // pred_check
        _
      $region54: #{tpu_custom_call.1} parent=5 // pred_check_branch
        %315 = sbr.rel (%p312) target = $region56
      $region55: #{tpu_custom_call.1} parent=5 // pred_region
        %s316 = ssub.s32 %s19, 1
        // Predicated region
        $region57: #{tpu_custom_call.1} parent=55 // pred_check
          %p317 = pneg %p108
        $region58: #{tpu_custom_call.1} parent=55 // pred_check_branch
          %319 = sbr.rel (%p317) target = $region60
        $region59: #{tpu_custom_call.1} parent=55 // pred_region
          %320 = dma.done [#allocation7], 20480
        $region60: #{tpu_custom_call.1} parent=55 // pred_fallthru
          _
        // Predicated region
        $region61: #{tpu_custom_call.1} parent=55 // pred_check
          %p321 = pneg %p150
        $region62: #{tpu_custom_call.1} parent=55 // pred_check_branch
          %323 = sbr.rel (%p321) target = $region64
        $region63: #{tpu_custom_call.1} parent=55 // pred_region
          %324 = dma.done [#allocation9], 12288
        $region64: #{tpu_custom_call.1} parent=55 // pred_fallthru
          _
        %p325 = scmp.lt.s32.totalorder %s24, 1
        %s326 = scalar_select %p325, %s24, 1
        %s327 = smul.addr %s326, 2
        %s328 = smul.addr %s327, 8
        %s329 = scalar_lea.vmem %s0, %s328
        %p330 = pneg %p45
        %p331 = pneg %p42
        %p332 = pneg %p66
        %p333 = pneg %p63
        %p334 = pneg %p87
        %p335 = pneg %p84
        %p336 = pneg %p108
        %p337 = pneg %p105
        %p338 = pneg %p129
        %p339 = pneg %p126
        %p340 = pneg %p150
        %p341 = pneg %p147
        %p342 = pneg %p171
        %p343 = pneg %p168
        %p344 = pneg %p192
        %p345 = pneg %p189
        %p346 = pneg %p213
        %p347 = pneg %p210
        %p348 = pneg %p239
        %p349 = pneg %p236
        %p350 = scmp.lt.s32.totalorder %s24, 1
        %s351 = scalar_select %p350, %s24, 1
        %s352 = scalar_lea.vmem %s9, %s351
        %p353 = scmp.lt.s32.totalorder %s24, 1
        %s354 = scalar_select %p353, %s24, 1
        %s355 = smul.addr %s354, 2
        %s356 = smul.addr %s355, 8
        %s357 = scalar_lea.vmem %s0, %s356
        %p358 = scmp.lt.s32.totalorder %s24, 1
        %s359 = scalar_select %p358, %s24, 1
        %s360 = scalar_lea.vmem %s9, %s359
        %v361 = vld [vmem:[%s357] sm:$0xff]
        %v362 = vld [vmem:[%s357 + $0x8] sm:$0xff]
        %vm363 = vcmask 26624
        %364 = vst.msk [vmem:[#allocation2] sm:$0x7] %vm363, 0.0
        %365 = vst.msk [vmem:[#allocation2 + $0x13] sm:$0x7] %vm363, 0.0
        %vm366 = vcmask 31744
        %367 = vst.msk [vmem:[#allocation2 + $0x3] sm:$0xff] %vm366, %v361
        %368 = vst.msk [vmem:[#allocation2 + $0xb] sm:$0xff] %vm366, %v362
        %v369 = vld [vmem:[#allocation2] sm:$0xff]
        %v370 = vld [vmem:[#allocation2 + $0x8] sm:$0xff]
        %v371 = vld [vmem:[%s1] sm:$0xf]
        %v372 = vld [vmem:[#allocation2 + $0x1] sm:$0xff]
        %v373 = vld [vmem:[#allocation2 + $0x9] sm:$0xff]
        %s374 = scalar_lea.vmem %s1, 4
        %v375 = vld [vmem:[%s374] sm:$0xf]
        %v377 = vsel %vm366, %v372, 0
        %v380 = vsel %vm366, %v373, 0
        %vm382 = vcmask 1043456
        %v384 = vsel %vm382, %v375, 0
        %386 = vmatprep.subr.mxu0 0.0
        %387 = vmatpush1.msra.mxu0 0.0
        %388 = vmatprep.subr.mxu0 0.0
        %389 = vmatpush1.msra.mxu0 0.0
        %390 = vmatprep.subr.mxu0 0.0
        %391 = vmatpush1.msra.mxu0 0.0
        %392 = vmatprep.subr.mxu0 0.0
        %393 = vmatpush1.msra.mxu0 0.0
        %394 = vmatprep.subr.mxu0 0.0
        %395 = vmatpush1.msra.mxu0 0.0
        %396 = vmatprep.subr.mxu0 0.0
        %397 = vmatpush1.msra.mxu0 0.0
        %398 = vmatprep.subr.mxu0 0.0
        %399 = vmatpush1.msra.mxu0 0.0
        %400 = vmatprep.subr.mxu0 0.0
        %401 = vmatpush1.msra.mxu0 0.0
        %402 = vmatprep.subr.mxu0 0.0
        %403 = vmatpush1.msra.mxu0 0.0
        %404 = vmatprep.subr.mxu0 0.0
        %405 = vmatpush1.msra.mxu0 0.0
        %406 = vmatprep.subr.mxu0 0.0
        %407 = vmatpush1.msra.mxu0 0.0
        %408 = vmatprep.subr.mxu0 0.0
        %409 = vmatpush1.msra.mxu0 0.0
        %410 = vmatprep.subr.mxu0 0.0
        %411 = vmatpush1.msra.mxu0 0.0
        %412 = vmatprep.subr.mxu0 0.0
        %413 = vmatpush1.msra.mxu0 0.0
        %414 = vmatprep.subr.mxu0 0.0
        %415 = vmatpush1.msra.mxu0 0.0
        %416 = vmatprep.subr.mxu0 0.0
        %417 = vmatpush1.msra.mxu0 %v384
        %418 = vmatprep.subr.mxu0 0.0
        %419 = vmatpush2.msra.mxu0 0.0
        %420 = vmatprep.subr.mxu0 0.0
        %421 = vmatpush2.msra.mxu0 0.0
        %422 = vmatprep.subr.mxu0 0.0
        %423 = vmatpush2.msra.mxu0 0.0
        %424 = vmatprep.subr.mxu0 0.0
        %425 = vmatpush2.msra.mxu0 0.0
        %426 = vmatprep.subr.mxu0 0.0
        %427 = vmatpush2.msra.mxu0 0.0
        %428 = vmatprep.subr.mxu0 0.0
        %429 = vmatpush2.msra.mxu0 0.0
        %430 = vmatprep.subr.mxu0 0.0
        %431 = vmatpush2.msra.mxu0 0.0
        %432 = vmatprep.subr.mxu0 0.0
        %433 = vmatpush2.msra.mxu0 0.0
        %434 = vmatprep.subr.mxu0 0.0
        %435 = vmatpush2.msra.mxu0 0.0
        %436 = vmatprep.subr.mxu0 0.0
        %437 = vmatpush2.msra.mxu0 0.0
        %438 = vmatprep.subr.mxu0 0.0
        %439 = vmatpush2.msra.mxu0 0.0
        %440 = vmatprep.subr.mxu0 0.0
        %441 = vmatpush2.msra.mxu0 0.0
        %442 = vmatprep.subr.mxu0 0.0
        %443 = vmatpush2.msra.mxu0 0.0
        %444 = vmatprep.subr.mxu0 0.0
        %445 = vmatpush2.msra.mxu0 0.0
        %446 = vmatprep.subr.mxu0 0.0
        %447 = vmatpush2.msra.mxu0 0.0
        %448 = vmatprep.subr.mxu0 0.0
        %449 = vmatpush2.msra.mxu0 0.0
        %450 = vmatprep.mubr.f32.mxu0 0.0
        %451 = vmatmul.mubr.f32.gmra.mxu0 %v377
        %v452 = vpop.f32.mrf.mxu0
        %v453 = vadd.f32 0.0, %v452
        %v454 = vpop.f32.mrf.mxu0
        %455 = vmatprep.mubr.f32.mxu0 0.0
        %456 = vmatmul.mubr.f32.gmra.mxu0 %v380
        %v457 = vpop.f32.mrf.mxu0
        %v458 = vadd.f32 0.0, %v457
        %v459 = vpop.f32.mrf.mxu0
        %460 = vdwg.mxu0
        %v462 = vsel %vm366, %v369, 0
        %v465 = vsel %vm366, %v370, 0
        %v468 = vsel %vm382, %v371, 0
        %470 = vmatprep.subr.mxu0 0.0
        %471 = vmatpush1.msra.mxu0 0.0
        %472 = vmatprep.subr.mxu0 0.0
        %473 = vmatpush1.msra.mxu0 0.0
        %474 = vmatprep.subr.mxu0 0.0
        %475 = vmatpush1.msra.mxu0 0.0
        %476 = vmatprep.subr.mxu0 0.0
        %477 = vmatpush1.msra.mxu0 0.0
        %478 = vmatprep.subr.mxu0 0.0
        %479 = vmatpush1.msra.mxu0 0.0
        %480 = vmatprep.subr.mxu0 0.0
        %481 = vmatpush1.msra.mxu0 0.0
        %482 = vmatprep.subr.mxu0 0.0
        %483 = vmatpush1.msra.mxu0 0.0
        %484 = vmatprep.subr.mxu0 0.0
        %485 = vmatpush1.msra.mxu0 0.0
        %486 = vmatprep.subr.mxu0 0.0
        %487 = vmatpush1.msra.mxu0 0.0
        %488 = vmatprep.subr.mxu0 0.0
        %489 = vmatpush1.msra.mxu0 0.0
        %490 = vmatprep.subr.mxu0 0.0
        %491 = vmatpush1.msra.mxu0 0.0
        %492 = vmatprep.subr.mxu0 0.0
        %493 = vmatpush1.msra.mxu0 0.0
        %494 = vmatprep.subr.mxu0 0.0
        %495 = vmatpush1.msra.mxu0 0.0
        %496 = vmatprep.subr.mxu0 0.0
        %497 = vmatpush1.msra.mxu0 0.0
        %498 = vmatprep.subr.mxu0 0.0
        %499 = vmatpush1.msra.mxu0 0.0
        %500 = vmatprep.subr.mxu0 0.0
        %501 = vmatpush1.msra.mxu0 %v468
        %502 = vmatprep.subr.mxu0 0.0
        %503 = vmatpush2.msra.mxu0 0.0
        %504 = vmatprep.subr.mxu0 0.0
        %505 = vmatpush2.msra.mxu0 0.0
        %506 = vmatprep.subr.mxu0 0.0
        %507 = vmatpush2.msra.mxu0 0.0
        %508 = vmatprep.subr.mxu0 0.0
        %509 = vmatpush2.msra.mxu0 0.0
        %510 = vmatprep.subr.mxu0 0.0
        %511 = vmatpush2.msra.mxu0 0.0
        %512 = vmatprep.subr.mxu0 0.0
        %513 = vmatpush2.msra.mxu0 0.0
        %514 = vmatprep.subr.mxu0 0.0
        %515 = vmatpush2.msra.mxu0 0.0
        %516 = vmatprep.subr.mxu0 0.0
        %517 = vmatpush2.msra.mxu0 0.0
        %518 = vmatprep.subr.mxu0 0.0
        %519 = vmatpush2.msra.mxu0 0.0
        %520 = vmatprep.subr.mxu0 0.0
        %521 = vmatpush2.msra.mxu0 0.0
        %522 = vmatprep.subr.mxu0 0.0
        %523 = vmatpush2.msra.mxu0 0.0
        %524 = vmatprep.subr.mxu0 0.0
        %525 = vmatpush2.msra.mxu0 0.0
        %526 = vmatprep.subr.mxu0 0.0
        %527 = vmatpush2.msra.mxu0 0.0
        %528 = vmatprep.subr.mxu0 0.0
        %529 = vmatpush2.msra.mxu0 0.0
        %530 = vmatprep.subr.mxu0 0.0
        %531 = vmatpush2.msra.mxu0 0.0
        %532 = vmatprep.subr.mxu0 0.0
        %533 = vmatpush2.msra.mxu0 0.0
        %534 = vmatprep.mubr.f32.mxu0 0.0
        %535 = vmatmul.mubr.f32.gmra.mxu0 %v462
        %v536 = vpop.f32.mrf.mxu0
        %v537 = vadd.f32 %v453, %v536
        %v538 = vpop.f32.mrf.mxu0
        %539 = vmatprep.mubr.f32.mxu0 0.0
        %540 = vmatmul.mubr.f32.gmra.mxu0 %v465
        %v541 = vpop.f32.mrf.mxu0
        %v542 = vadd.f32 %v458, %v541
        %v543 = vpop.f32.mrf.mxu0
        %544 = vdwg.mxu0
        %v545 = vld [vmem:[#allocation2 + $0x2] sm:$0xff]
        %v546 = vld [vmem:[#allocation2 + $0xa] sm:$0xff]
        %s547 = scalar_lea.vmem %s1, 8
        %v548 = vld [vmem:[%s547] sm:$0xf]
        %v550 = vsel %vm366, %v545, 0
        %v553 = vsel %vm366, %v546, 0
        %v556 = vsel %vm382, %v548, 0
        %558 = vmatprep.subr.mxu0 0.0
        %559 = vmatpush1.msra.mxu0 0.0
        %560 = vmatprep.subr.mxu0 0.0
        %561 = vmatpush1.msra.mxu0 0.0
        %562 = vmatprep.subr.mxu0 0.0
        %563 = vmatpush1.msra.mxu0 0.0
        %564 = vmatprep.subr.mxu0 0.0
        %565 = vmatpush1.msra.mxu0 0.0
        %566 = vmatprep.subr.mxu0 0.0
        %567 = vmatpush1.msra.mxu0 0.0
        %568 = vmatprep.subr.mxu0 0.0
        %569 = vmatpush1.msra.mxu0 0.0
        %570 = vmatprep.subr.mxu0 0.0
        %571 = vmatpush1.msra.mxu0 0.0
        %572 = vmatprep.subr.mxu0 0.0
        %573 = vmatpush1.msra.mxu0 0.0
        %574 = vmatprep.subr.mxu0 0.0
        %575 = vmatpush1.msra.mxu0 0.0
        %576 = vmatprep.subr.mxu0 0.0
        %577 = vmatpush1.msra.mxu0 0.0
        %578 = vmatprep.subr.mxu0 0.0
        %579 = vmatpush1.msra.mxu0 0.0
        %580 = vmatprep.subr.mxu0 0.0
        %581 = vmatpush1.msra.mxu0 0.0
        %582 = vmatprep.subr.mxu0 0.0
        %583 = vmatpush1.msra.mxu0 0.0
        %584 = vmatprep.subr.mxu0 0.0
        %585 = vmatpush1.msra.mxu0 0.0
        %586 = vmatprep.subr.mxu0 0.0
        %587 = vmatpush1.msra.mxu0 0.0
        %588 = vmatprep.subr.mxu0 0.0
        %589 = vmatpush1.msra.mxu0 %v556
        %590 = vmatprep.subr.mxu0 0.0
        %591 = vmatpush2.msra.mxu0 0.0
        %592 = vmatprep.subr.mxu0 0.0
        %593 = vmatpush2.msra.mxu0 0.0
        %594 = vmatprep.subr.mxu0 0.0
        %595 = vmatpush2.msra.mxu0 0.0
        %596 = vmatprep.subr.mxu0 0.0
        %597 = vmatpush2.msra.mxu0 0.0
        %598 = vmatprep.subr.mxu0 0.0
        %599 = vmatpush2.msra.mxu0 0.0
        %600 = vmatprep.subr.mxu0 0.0
        %601 = vmatpush2.msra.mxu0 0.0
        %602 = vmatprep.subr.mxu0 0.0
        %603 = vmatpush2.msra.mxu0 0.0
        %604 = vmatprep.subr.mxu0 0.0
        %605 = vmatpush2.msra.mxu0 0.0
        %606 = vmatprep.subr.mxu0 0.0
        %607 = vmatpush2.msra.mxu0 0.0
        %608 = vmatprep.subr.mxu0 0.0
        %609 = vmatpush2.msra.mxu0 0.0
        %610 = vmatprep.subr.mxu0 0.0
        %611 = vmatpush2.msra.mxu0 0.0
        %612 = vmatprep.subr.mxu0 0.0
        %613 = vmatpush2.msra.mxu0 0.0
        %614 = vmatprep.subr.mxu0 0.0
        %615 = vmatpush2.msra.mxu0 0.0
        %616 = vmatprep.subr.mxu0 0.0
        %617 = vmatpush2.msra.mxu0 0.0
        %618 = vmatprep.subr.mxu0 0.0
        %619 = vmatpush2.msra.mxu0 0.0
        %620 = vmatprep.subr.mxu0 0.0
        %621 = vmatpush2.msra.mxu0 0.0
        %622 = vmatprep.mubr.f32.mxu0 0.0
        %623 = vmatmul.mubr.f32.gmra.mxu0 %v550
        %v624 = vpop.f32.mrf.mxu0
        %v625 = vadd.f32 0.0, %v624
        %v626 = vpop.f32.mrf.mxu0
        %627 = vmatprep.mubr.f32.mxu0 0.0
        %628 = vmatmul.mubr.f32.gmra.mxu0 %v553
        %v629 = vpop.f32.mrf.mxu0
        %v630 = vadd.f32 0.0, %v629
        %v631 = vpop.f32.mrf.mxu0
        %632 = vdwg.mxu0
        %v633 = vadd.f32 %v537, %v625
        %v634 = vadd.f32 %v542, %v630
        %v635 = vld [vmem:[#allocation2 + $0x3] sm:$0xff]
        %v636 = vld [vmem:[#allocation2 + $0xb] sm:$0xff]
        %s637 = scalar_lea.vmem %s1, 12
        %v638 = vld [vmem:[%s637] sm:$0xf]
        %v640 = vsel %vm366, %v635, 0
        %v643 = vsel %vm366, %v636, 0
        %v646 = vsel %vm382, %v638, 0
        %648 = vmatprep.subr.mxu0 0.0
        %649 = vmatpush1.msra.mxu0 0.0
        %650 = vmatprep.subr.mxu0 0.0
        %651 = vmatpush1.msra.mxu0 0.0
        %652 = vmatprep.subr.mxu0 0.0
        %653 = vmatpush1.msra.mxu0 0.0
        %654 = vmatprep.subr.mxu0 0.0
        %655 = vmatpush1.msra.mxu0 0.0
        %656 = vmatprep.subr.mxu0 0.0
        %657 = vmatpush1.msra.mxu0 0.0
        %658 = vmatprep.subr.mxu0 0.0
        %659 = vmatpush1.msra.mxu0 0.0
        %660 = vmatprep.subr.mxu0 0.0
        %661 = vmatpush1.msra.mxu0 0.0
        %662 = vmatprep.subr.mxu0 0.0
        %663 = vmatpush1.msra.mxu0 0.0
        %664 = vmatprep.subr.mxu0 0.0
        %665 = vmatpush1.msra.mxu0 0.0
        %666 = vmatprep.subr.mxu0 0.0
        %667 = vmatpush1.msra.mxu0 0.0
        %668 = vmatprep.subr.mxu0 0.0
        %669 = vmatpush1.msra.mxu0 0.0
        %670 = vmatprep.subr.mxu0 0.0
        %671 = vmatpush1.msra.mxu0 0.0
        %672 = vmatprep.subr.mxu0 0.0
        %673 = vmatpush1.msra.mxu0 0.0
        %674 = vmatprep.subr.mxu0 0.0
        %675 = vmatpush1.msra.mxu0 0.0
        %676 = vmatprep.subr.mxu0 0.0
        %677 = vmatpush1.msra.mxu0 0.0
        %678 = vmatprep.subr.mxu0 0.0
        %679 = vmatpush1.msra.mxu0 %v646
        %680 = vmatprep.subr.mxu0 0.0
        %681 = vmatpush2.msra.mxu0 0.0
        %682 = vmatprep.subr.mxu0 0.0
        %683 = vmatpush2.msra.mxu0 0.0
        %684 = vmatprep.subr.mxu0 0.0
        %685 = vmatpush2.msra.mxu0 0.0
        %686 = vmatprep.subr.mxu0 0.0
        %687 = vmatpush2.msra.mxu0 0.0
        %688 = vmatprep.subr.mxu0 0.0
        %689 = vmatpush2.msra.mxu0 0.0
        %690 = vmatprep.subr.mxu0 0.0
        %691 = vmatpush2.msra.mxu0 0.0
        %692 = vmatprep.subr.mxu0 0.0
        %693 = vmatpush2.msra.mxu0 0.0
        %694 = vmatprep.subr.mxu0 0.0
        %695 = vmatpush2.msra.mxu0 0.0
        %696 = vmatprep.subr.mxu0 0.0
        %697 = vmatpush2.msra.mxu0 0.0
        %698 = vmatprep.subr.mxu0 0.0
        %699 = vmatpush2.msra.mxu0 0.0
        %700 = vmatprep.subr.mxu0 0.0
        %701 = vmatpush2.msra.mxu0 0.0
        %702 = vmatprep.subr.mxu0 0.0
        %703 = vmatpush2.msra.mxu0 0.0
        %704 = vmatprep.subr.mxu0 0.0
        %705 = vmatpush2.msra.mxu0 0.0
        %706 = vmatprep.subr.mxu0 0.0
        %707 = vmatpush2.msra.mxu0 0.0
        %708 = vmatprep.subr.mxu0 0.0
        %709 = vmatpush2.msra.mxu0 0.0
        %710 = vmatprep.subr.mxu0 0.0
        %711 = vmatpush2.msra.mxu0 0.0
        %712 = vmatprep.mubr.f32.mxu0 0.0
        %713 = vmatmul.mubr.f32.gmra.mxu0 %v640
        %v714 = vpop.f32.mrf.mxu0
        %v715 = vadd.f32 0.0, %v714
        %v716 = vpop.f32.mrf.mxu0
        %717 = vmatprep.mubr.f32.mxu0 0.0
        %718 = vmatmul.mubr.f32.gmra.mxu0 %v643
        %v719 = vpop.f32.mrf.mxu0
        %v720 = vadd.f32 0.0, %v719
        %v721 = vpop.f32.mrf.mxu0
        %722 = vdwg.mxu0
        %v723 = vadd.f32 %v633, %v715
        %v724 = vadd.f32 %v634, %v720
        %v725 = vld [vmem:[#allocation2 + $0x4] sm:$0xff]
        %v726 = vld [vmem:[#allocation2 + $0xc] sm:$0xff]
        %s727 = scalar_lea.vmem %s1, 16
        %v728 = vld [vmem:[%s727] sm:$0xf]
        %v730 = vsel %vm366, %v725, 0
        %v733 = vsel %vm366, %v726, 0
        %v736 = vsel %vm382, %v728, 0
        %738 = vmatprep.subr.mxu0 0.0
        %739 = vmatpush1.msra.mxu0 0.0
        %740 = vmatprep.subr.mxu0 0.0
        %741 = vmatpush1.msra.mxu0 0.0
        %742 = vmatprep.subr.mxu0 0.0
        %743 = vmatpush1.msra.mxu0 0.0
        %744 = vmatprep.subr.mxu0 0.0
        %745 = vmatpush1.msra.mxu0 0.0
        %746 = vmatprep.subr.mxu0 0.0
        %747 = vmatpush1.msra.mxu0 0.0
        %748 = vmatprep.subr.mxu0 0.0
        %749 = vmatpush1.msra.mxu0 0.0
        %750 = vmatprep.subr.mxu0 0.0
        %751 = vmatpush1.msra.mxu0 0.0
        %752 = vmatprep.subr.mxu0 0.0
        %753 = vmatpush1.msra.mxu0 0.0
        %754 = vmatprep.subr.mxu0 0.0
        %755 = vmatpush1.msra.mxu0 0.0
        %756 = vmatprep.subr.mxu0 0.0
        %757 = vmatpush1.msra.mxu0 0.0
        %758 = vmatprep.subr.mxu0 0.0
        %759 = vmatpush1.msra.mxu0 0.0
        %760 = vmatprep.subr.mxu0 0.0
        %761 = vmatpush1.msra.mxu0 0.0
        %762 = vmatprep.subr.mxu0 0.0
        %763 = vmatpush1.msra.mxu0 0.0
        %764 = vmatprep.subr.mxu0 0.0
        %765 = vmatpush1.msra.mxu0 0.0
        %766 = vmatprep.subr.mxu0 0.0
        %767 = vmatpush1.msra.mxu0 0.0
        %768 = vmatprep.subr.mxu0 0.0
        %769 = vmatpush1.msra.mxu0 %v736
        %770 = vmatprep.subr.mxu0 0.0
        %771 = vmatpush2.msra.mxu0 0.0
        %772 = vmatprep.subr.mxu0 0.0
        %773 = vmatpush2.msra.mxu0 0.0
        %774 = vmatprep.subr.mxu0 0.0
        %775 = vmatpush2.msra.mxu0 0.0
        %776 = vmatprep.subr.mxu0 0.0
        %777 = vmatpush2.msra.mxu0 0.0
        %778 = vmatprep.subr.mxu0 0.0
        %779 = vmatpush2.msra.mxu0 0.0
        %780 = vmatprep.subr.mxu0 0.0
        %781 = vmatpush2.msra.mxu0 0.0
        %782 = vmatprep.subr.mxu0 0.0
        %783 = vmatpush2.msra.mxu0 0.0
        %784 = vmatprep.subr.mxu0 0.0
        %785 = vmatpush2.msra.mxu0 0.0
        %786 = vmatprep.subr.mxu0 0.0
        %787 = vmatpush2.msra.mxu0 0.0
        %788 = vmatprep.subr.mxu0 0.0
        %789 = vmatpush2.msra.mxu0 0.0
        %790 = vmatprep.subr.mxu0 0.0
        %791 = vmatpush2.msra.mxu0 0.0
        %792 = vmatprep.subr.mxu0 0.0
        %793 = vmatpush2.msra.mxu0 0.0
        %794 = vmatprep.subr.mxu0 0.0
        %795 = vmatpush2.msra.mxu0 0.0
        %796 = vmatprep.subr.mxu0 0.0
        %797 = vmatpush2.msra.mxu0 0.0
        %798 = vmatprep.subr.mxu0 0.0
        %799 = vmatpush2.msra.mxu0 0.0
        %800 = vmatprep.subr.mxu0 0.0
        %801 = vmatpush2.msra.mxu0 0.0
        %802 = vmatprep.mubr.f32.mxu0 0.0
        %803 = vmatmul.mubr.f32.gmra.mxu0 %v730
        %v804 = vpop.f32.mrf.mxu0
        %v805 = vadd.f32 0.0, %v804
        %v806 = vpop.f32.mrf.mxu0
        %807 = vmatprep.mubr.f32.mxu0 0.0
        %808 = vmatmul.mubr.f32.gmra.mxu0 %v733
        %v809 = vpop.f32.mrf.mxu0
        %v810 = vadd.f32 0.0, %v809
        %v811 = vpop.f32.mrf.mxu0
        %812 = vdwg.mxu0
        %v813 = vadd.f32 %v723, %v805
        %v814 = vadd.f32 %v724, %v810
        %v815 = vld [vmem:[#allocation2 + $0x5] sm:$0xff]
        %v816 = vld [vmem:[#allocation2 + $0xd] sm:$0xff]
        %s817 = scalar_lea.vmem %s1, 20
        %v818 = vld [vmem:[%s817] sm:$0xf]
        %v820 = vsel %vm366, %v815, 0
        %v823 = vsel %vm366, %v816, 0
        %v826 = vsel %vm382, %v818, 0
        %828 = vmatprep.subr.mxu0 0.0
        %829 = vmatpush1.msra.mxu0 0.0
        %830 = vmatprep.subr.mxu0 0.0
        %831 = vmatpush1.msra.mxu0 0.0
        %832 = vmatprep.subr.mxu0 0.0
        %833 = vmatpush1.msra.mxu0 0.0
        %834 = vmatprep.subr.mxu0 0.0
        %835 = vmatpush1.msra.mxu0 0.0
        %836 = vmatprep.subr.mxu0 0.0
        %837 = vmatpush1.msra.mxu0 0.0
        %838 = vmatprep.subr.mxu0 0.0
        %839 = vmatpush1.msra.mxu0 0.0
        %840 = vmatprep.subr.mxu0 0.0
        %841 = vmatpush1.msra.mxu0 0.0
        %842 = vmatprep.subr.mxu0 0.0
        %843 = vmatpush1.msra.mxu0 0.0
        %844 = vmatprep.subr.mxu0 0.0
        %845 = vmatpush1.msra.mxu0 0.0
        %846 = vmatprep.subr.mxu0 0.0
        %847 = vmatpush1.msra.mxu0 0.0
        %848 = vmatprep.subr.mxu0 0.0
        %849 = vmatpush1.msra.mxu0 0.0
        %850 = vmatprep.subr.mxu0 0.0
        %851 = vmatpush1.msra.mxu0 0.0
        %852 = vmatprep.subr.mxu0 0.0
        %853 = vmatpush1.msra.mxu0 0.0
        %854 = vmatprep.subr.mxu0 0.0
        %855 = vmatpush1.msra.mxu0 0.0
        %856 = vmatprep.subr.mxu0 0.0
        %857 = vmatpush1.msra.mxu0 0.0
        %858 = vmatprep.subr.mxu0 0.0
        %859 = vmatpush1.msra.mxu0 %v826
        %860 = vmatprep.subr.mxu0 0.0
        %861 = vmatpush2.msra.mxu0 0.0
        %862 = vmatprep.subr.mxu0 0.0
        %863 = vmatpush2.msra.mxu0 0.0
        %864 = vmatprep.subr.mxu0 0.0
        %865 = vmatpush2.msra.mxu0 0.0
        %866 = vmatprep.subr.mxu0 0.0
        %867 = vmatpush2.msra.mxu0 0.0
        %868 = vmatprep.subr.mxu0 0.0
        %869 = vmatpush2.msra.mxu0 0.0
        %870 = vmatprep.subr.mxu0 0.0
        %871 = vmatpush2.msra.mxu0 0.0
        %872 = vmatprep.subr.mxu0 0.0
        %873 = vmatpush2.msra.mxu0 0.0
        %874 = vmatprep.subr.mxu0 0.0
        %875 = vmatpush2.msra.mxu0 0.0
        %876 = vmatprep.subr.mxu0 0.0
        %877 = vmatpush2.msra.mxu0 0.0
        %878 = vmatprep.subr.mxu0 0.0
        %879 = vmatpush2.msra.mxu0 0.0
        %880 = vmatprep.subr.mxu0 0.0
        %881 = vmatpush2.msra.mxu0 0.0
        %882 = vmatprep.subr.mxu0 0.0
        %883 = vmatpush2.msra.mxu0 0.0
        %884 = vmatprep.subr.mxu0 0.0
        %885 = vmatpush2.msra.mxu0 0.0
        %886 = vmatprep.subr.mxu0 0.0
        %887 = vmatpush2.msra.mxu0 0.0
        %888 = vmatprep.subr.mxu0 0.0
        %889 = vmatpush2.msra.mxu0 0.0
        %890 = vmatprep.subr.mxu0 0.0
        %891 = vmatpush2.msra.mxu0 0.0
        %892 = vmatprep.mubr.f32.mxu0 0.0
        %893 = vmatmul.mubr.f32.gmra.mxu0 %v820
        %v894 = vpop.f32.mrf.mxu0
        %v895 = vadd.f32 0.0, %v894
        %v896 = vpop.f32.mrf.mxu0
        %897 = vmatprep.mubr.f32.mxu0 0.0
        %898 = vmatmul.mubr.f32.gmra.mxu0 %v823
        %v899 = vpop.f32.mrf.mxu0
        %v900 = vadd.f32 0.0, %v899
        %v901 = vpop.f32.mrf.mxu0
        %902 = vdwg.mxu0
        %v903 = vadd.f32 %v813, %v895
        %v904 = vadd.f32 %v814, %v900
        %v905 = vld [vmem:[#allocation2 + $0x6] sm:$0xff]
        %v906 = vld [vmem:[#allocation2 + $0xe] sm:$0xff]
        %s907 = scalar_lea.vmem %s1, 24
        %v908 = vld [vmem:[%s907] sm:$0xf]
        %v910 = vsel %vm366, %v905, 0
        %v913 = vsel %vm366, %v906, 0
        %v916 = vsel %vm382, %v908, 0
        %918 = vmatprep.subr.mxu0 0.0
        %919 = vmatpush1.msra.mxu0 0.0
        %920 = vmatprep.subr.mxu0 0.0
        %921 = vmatpush1.msra.mxu0 0.0
        %922 = vmatprep.subr.mxu0 0.0
        %923 = vmatpush1.msra.mxu0 0.0
        %924 = vmatprep.subr.mxu0 0.0
        %925 = vmatpush1.msra.mxu0 0.0
        %926 = vmatprep.subr.mxu0 0.0
        %927 = vmatpush1.msra.mxu0 0.0
        %928 = vmatprep.subr.mxu0 0.0
        %929 = vmatpush1.msra.mxu0 0.0
        %930 = vmatprep.subr.mxu0 0.0
        %931 = vmatpush1.msra.mxu0 0.0
        %932 = vmatprep.subr.mxu0 0.0
        %933 = vmatpush1.msra.mxu0 0.0
        %934 = vmatprep.subr.mxu0 0.0
        %935 = vmatpush1.msra.mxu0 0.0
        %936 = vmatprep.subr.mxu0 0.0
        %937 = vmatpush1.msra.mxu0 0.0
        %938 = vmatprep.subr.mxu0 0.0
        %939 = vmatpush1.msra.mxu0 0.0
        %940 = vmatprep.subr.mxu0 0.0
        %941 = vmatpush1.msra.mxu0 0.0
        %942 = vmatprep.subr.mxu0 0.0
        %943 = vmatpush1.msra.mxu0 0.0
        %944 = vmatprep.subr.mxu0 0.0
        %945 = vmatpush1.msra.mxu0 0.0
        %946 = vmatprep.subr.mxu0 0.0
        %947 = vmatpush1.msra.mxu0 0.0
        %948 = vmatprep.subr.mxu0 0.0
        %949 = vmatpush1.msra.mxu0 %v916
        %950 = vmatprep.subr.mxu0 0.0
        %951 = vmatpush2.msra.mxu0 0.0
        %952 = vmatprep.subr.mxu0 0.0
        %953 = vmatpush2.msra.mxu0 0.0
        %954 = vmatprep.subr.mxu0 0.0
        %955 = vmatpush2.msra.mxu0 0.0
        %956 = vmatprep.subr.mxu0 0.0
        %957 = vmatpush2.msra.mxu0 0.0
        %958 = vmatprep.subr.mxu0 0.0
        %959 = vmatpush2.msra.mxu0 0.0
        %960 = vmatprep.subr.mxu0 0.0
        %961 = vmatpush2.msra.mxu0 0.0
        %962 = vmatprep.subr.mxu0 0.0
        %963 = vmatpush2.msra.mxu0 0.0
        %964 = vmatprep.subr.mxu0 0.0
        %965 = vmatpush2.msra.mxu0 0.0
        %966 = vmatprep.subr.mxu0 0.0
        %967 = vmatpush2.msra.mxu0 0.0
        %968 = vmatprep.subr.mxu0 0.0
        %969 = vmatpush2.msra.mxu0 0.0
        %970 = vmatprep.subr.mxu0 0.0
        %971 = vmatpush2.msra.mxu0 0.0
        %972 = vmatprep.subr.mxu0 0.0
        %973 = vmatpush2.msra.mxu0 0.0
        %974 = vmatprep.subr.mxu0 0.0
        %975 = vmatpush2.msra.mxu0 0.0
        %976 = vmatprep.subr.mxu0 0.0
        %977 = vmatpush2.msra.mxu0 0.0
        %978 = vmatprep.subr.mxu0 0.0
        %979 = vmatpush2.msra.mxu0 0.0
        %980 = vmatprep.subr.mxu0 0.0
        %981 = vmatpush2.msra.mxu0 0.0
        %982 = vmatprep.mubr.f32.mxu0 0.0
        %983 = vmatmul.mubr.f32.gmra.mxu0 %v910
        %v984 = vpop.f32.mrf.mxu0
        %v985 = vadd.f32 0.0, %v984
        %v986 = vpop.f32.mrf.mxu0
        %987 = vmatprep.mubr.f32.mxu0 0.0
        %988 = vmatmul.mubr.f32.gmra.mxu0 %v913
        %v989 = vpop.f32.mrf.mxu0
        %v990 = vadd.f32 0.0, %v989
        %v991 = vpop.f32.mrf.mxu0
        %992 = vdwg.mxu0
        %v993 = vadd.f32 %v903, %v985
        %v994 = vadd.f32 %v904, %v990
        %v995 = vld [vmem:[%s2] sm:$0x1]
        %v996 = vlaneseq
        %v997 = vshrl.u32 %v996, 7
        %v998 = vsub.s32 0, %v997
        %v999 = vrot.slane %v995, %v998
        %v1000 = vmul.f32 %v993, %v999
        %v1001 = vmul.f32 %v994, %v999
        %v1002 = vld [vmem:[%s2 + $0x1] sm:$0x1]
        %v1003 = vlaneseq
        %v1004 = vshrl.u32 %v1003, 7
        %v1005 = vsub.s32 0, %v1004
        %v1006 = vrot.slane %v1002, %v1005
        %v1007 = vadd.f32 %v1000, %v1006
        %v1008 = vadd.f32 %v1001, %v1006
        %v1009 = vmax.f32 %v1007, 0.0
        %v1010 = vmax.f32 %v1008, 0.0
        %1011 = vst [vmem:[#allocation3] sm:$0x3] 0.0
        %1012 = vst [vmem:[#allocation3 + $0x12] sm:$0x3] 0.0
        %1013 = vst [vmem:[#allocation3 + $0x2] sm:$0xff] %v1009
        %1014 = vst [vmem:[#allocation3 + $0xa] sm:$0xff] %v1010
        %v1015 = vld [vmem:[#allocation3] sm:$0xff]
        %v1016 = vld [vmem:[#allocation3 + $0x8] sm:$0xff]
        %v1017 = vld [vmem:[#allocation6] sm:$0xff]
        %v1018 = vld [vmem:[#allocation6 + $0x8] sm:$0xff]
        %v1019 = vld [vmem:[#allocation6 + $0x10] sm:$0xff]
        %v1020 = vld [vmem:[#allocation6 + $0x18] sm:$0xff]
        %v1021 = vld [vmem:[#allocation6 + $0x20] sm:$0xff]
        %v1022 = vld [vmem:[#allocation6 + $0x28] sm:$0xff]
        %v1023 = vld [vmem:[#allocation6 + $0x30] sm:$0xff]
        %v1024 = vld [vmem:[#allocation6 + $0x38] sm:$0xff]
        %v1025 = vld [vmem:[#allocation6 + $0x40] sm:$0xff]
        %v1026 = vld [vmem:[#allocation6 + $0x48] sm:$0xff]
        %v1027 = vld [vmem:[#allocation6 + $0x50] sm:$0xff]
        %v1028 = vld [vmem:[#allocation6 + $0x58] sm:$0xff]
        %v1029 = vld [vmem:[#allocation6 + $0x60] sm:$0xff]
        %v1030 = vld [vmem:[#allocation6 + $0x68] sm:$0xff]
        %v1031 = vld [vmem:[#allocation6 + $0x70] sm:$0xff]
        %v1032 = vld [vmem:[#allocation6 + $0x78] sm:$0xff]
        %v1033 = vld [vmem:[#allocation6 + $0x80] sm:$0xff]
        %v1034 = vld [vmem:[#allocation6 + $0x88] sm:$0xff]
        %v1035 = vld [vmem:[#allocation6 + $0x90] sm:$0xff]
        %v1036 = vld [vmem:[#allocation6 + $0x98] sm:$0xff]
        %v1037 = vld [vmem:[#allocation6 + $0xa0] sm:$0xff]
        %v1038 = vld [vmem:[#allocation6 + $0xa8] sm:$0xff]
        %v1039 = vld [vmem:[#allocation6 + $0xb0] sm:$0xff]
        %v1040 = vld [vmem:[#allocation6 + $0xb8] sm:$0xff]
        %v1041 = vld [vmem:[#allocation6 + $0xc0] sm:$0xff]
        %v1042 = vld [vmem:[#allocation6 + $0xc8] sm:$0xff]
        %v1043 = vld [vmem:[#allocation6 + $0xd0] sm:$0xff]
        %v1044 = vld [vmem:[#allocation6 + $0xd8] sm:$0xff]
        %v1045 = vld [vmem:[#allocation6 + $0xe0] sm:$0xff]
        %v1046 = vld [vmem:[#allocation6 + $0xe8] sm:$0xff]
        %v1047 = vld [vmem:[#allocation6 + $0xf0] sm:$0xff]
        %v1048 = vld [vmem:[#allocation6 + $0xf8] sm:$0xff]
        %v1049 = vld [vmem:[#allocation3 + $0x1] sm:$0xff]
        %v1050 = vld [vmem:[#allocation3 + $0x9] sm:$0xff]
        %s1051 = scalar_lea.vmem [#allocation6], 256
        %v1052 = vld [vmem:[%s1051] sm:$0xff]
        %v1053 = vld [vmem:[%s1051 + $0x8] sm:$0xff]
        %v1054 = vld [vmem:[%s1051 + $0x10] sm:$0xff]
        %v1055 = vld [vmem:[%s1051 + $0x18] sm:$0xff]
        %v1056 = vld [vmem:[%s1051 + $0x20] sm:$0xff]
        %v1057 = vld [vmem:[%s1051 + $0x28] sm:$0xff]
        %v1058 = vld [vmem:[%s1051 + $0x30] sm:$0xff]
        %v1059 = vld [vmem:[%s1051 + $0x38] sm:$0xff]
        %v1060 = vld [vmem:[%s1051 + $0x40] sm:$0xff]
        %v1061 = vld [vmem:[%s1051 + $0x48] sm:$0xff]
        %v1062 = vld [vmem:[%s1051 + $0x50] sm:$0xff]
        %v1063 = vld [vmem:[%s1051 + $0x58] sm:$0xff]
        %v1064 = vld [vmem:[%s1051 + $0x60] sm:$0xff]
        %v1065 = vld [vmem:[%s1051 + $0x68] sm:$0xff]
        %v1066 = vld [vmem:[%s1051 + $0x70] sm:$0xff]
        %v1067 = vld [vmem:[%s1051 + $0x78] sm:$0xff]
        %v1068 = vld [vmem:[%s1051 + $0x80] sm:$0xff]
        %v1069 = vld [vmem:[%s1051 + $0x88] sm:$0xff]
        %v1070 = vld [vmem:[%s1051 + $0x90] sm:$0xff]
        %v1071 = vld [vmem:[%s1051 + $0x98] sm:$0xff]
        %v1072 = vld [vmem:[%s1051 + $0xa0] sm:$0xff]
        %v1073 = vld [vmem:[%s1051 + $0xa8] sm:$0xff]
        %v1074 = vld [vmem:[%s1051 + $0xb0] sm:$0xff]
        %v1075 = vld [vmem:[%s1051 + $0xb8] sm:$0xff]
        %v1076 = vld [vmem:[%s1051 + $0xc0] sm:$0xff]
        %v1077 = vld [vmem:[%s1051 + $0xc8] sm:$0xff]
        %v1078 = vld [vmem:[%s1051 + $0xd0] sm:$0xff]
        %v1079 = vld [vmem:[%s1051 + $0xd8] sm:$0xff]
        %v1080 = vld [vmem:[%s1051 + $0xe0] sm:$0xff]
        %v1081 = vld [vmem:[%s1051 + $0xe8] sm:$0xff]
        %v1082 = vld [vmem:[%s1051 + $0xf0] sm:$0xff]
        %v1083 = vld [vmem:[%s1051 + $0xf8] sm:$0xff]
        %1084 = vmatprep.subr.mxu0 %v1083
        %1085 = vmatpush1.msra.mxu0 %v1082
        %1086 = vmatprep.subr.mxu0 %v1081
        %1087 = vmatpush1.msra.mxu0 %v1080
        %1088 = vmatprep.subr.mxu0 %v1079
        %1089 = vmatpush1.msra.mxu0 %v1078
        %1090 = vmatprep.subr.mxu0 %v1077
        %1091 = vmatpush1.msra.mxu0 %v1076
        %1092 = vmatprep.subr.mxu0 %v1075
        %1093 = vmatpush1.msra.mxu0 %v1074
        %1094 = vmatprep.subr.mxu0 %v1073
        %1095 = vmatpush1.msra.mxu0 %v1072
        %1096 = vmatprep.subr.mxu0 %v1071
        %1097 = vmatpush1.msra.mxu0 %v1070
        %1098 = vmatprep.subr.mxu0 %v1069
        %1099 = vmatpush1.msra.mxu0 %v1068
        %1100 = vmatprep.subr.mxu0 %v1067
        %1101 = vmatpush1.msra.mxu0 %v1066
        %1102 = vmatprep.subr.mxu0 %v1065
        %1103 = vmatpush1.msra.mxu0 %v1064
        %1104 = vmatprep.subr.mxu0 %v1063
        %1105 = vmatpush1.msra.mxu0 %v1062
        %1106 = vmatprep.subr.mxu0 %v1061
        %1107 = vmatpush1.msra.mxu0 %v1060
        %1108 = vmatprep.subr.mxu0 %v1059
        %1109 = vmatpush1.msra.mxu0 %v1058
        %1110 = vmatprep.subr.mxu0 %v1057
        %1111 = vmatpush1.msra.mxu0 %v1056
        %1112 = vmatprep.subr.mxu0 %v1055
        %1113 = vmatpush1.msra.mxu0 %v1054
        %1114 = vmatprep.subr.mxu0 %v1053
        %1115 = vmatpush1.msra.mxu0 %v1052
        %1116 = vmatprep.subr.mxu0 0.0
        %1117 = vmatpush2.msra.mxu0 0.0
        %1118 = vmatprep.subr.mxu0 0.0
        %1119 = vmatpush2.msra.mxu0 0.0
        %1120 = vmatprep.subr.mxu0 0.0
        %1121 = vmatpush2.msra.mxu0 0.0
        %1122 = vmatprep.subr.mxu0 0.0
        %1123 = vmatpush2.msra.mxu0 0.0
        %1124 = vmatprep.subr.mxu0 0.0
        %1125 = vmatpush2.msra.mxu0 0.0
        %1126 = vmatprep.subr.mxu0 0.0
        %1127 = vmatpush2.msra.mxu0 0.0
        %1128 = vmatprep.subr.mxu0 0.0
        %1129 = vmatpush2.msra.mxu0 0.0
        %1130 = vmatprep.subr.mxu0 0.0
        %1131 = vmatpush2.msra.mxu0 0.0
        %1132 = vmatprep.subr.mxu0 0.0
        %1133 = vmatpush2.msra.mxu0 0.0
        %1134 = vmatprep.subr.mxu0 0.0
        %1135 = vmatpush2.msra.mxu0 0.0
        %1136 = vmatprep.subr.mxu0 0.0
        %1137 = vmatpush2.msra.mxu0 0.0
        %1138 = vmatprep.subr.mxu0 0.0
        %1139 = vmatpush2.msra.mxu0 0.0
        %1140 = vmatprep.subr.mxu0 0.0
        %1141 = vmatpush2.msra.mxu0 0.0
        %1142 = vmatprep.subr.mxu0 0.0
        %1143 = vmatpush2.msra.mxu0 0.0
        %1144 = vmatprep.subr.mxu0 0.0
        %1145 = vmatpush2.msra.mxu0 0.0
        %1146 = vmatprep.subr.mxu0 0.0
        %1147 = vmatpush2.msra.mxu0 0.0
        %1148 = vmatprep.mubr.f32.mxu0 0.0
        %1149 = vmatmul.mubr.f32.gmra.mxu0 %v1049
        %v1150 = vpop.f32.mrf.mxu0
        %v1151 = vadd.f32 0.0, %v1150
        %v1152 = vpop.f32.mrf.mxu0
        %v1153 = vadd.f32 0.0, %v1152
        %1154 = vmatprep.mubr.f32.mxu0 0.0
        %1155 = vmatmul.mubr.f32.gmra.mxu0 %v1050
        %v1156 = vpop.f32.mrf.mxu0
        %v1157 = vadd.f32 0.0, %v1156
        %v1158 = vpop.f32.mrf.mxu0
        %v1159 = vadd.f32 0.0, %v1158
        %1160 = vdwg.mxu0
        %1161 = vmatprep.subr.mxu0 %v1048
        %1162 = vmatpush1.msra.mxu0 %v1047
        %1163 = vmatprep.subr.mxu0 %v1046
        %1164 = vmatpush1.msra.mxu0 %v1045
        %1165 = vmatprep.subr.mxu0 %v1044
        %1166 = vmatpush1.msra.mxu0 %v1043
        %1167 = vmatprep.subr.mxu0 %v1042
        %1168 = vmatpush1.msra.mxu0 %v1041
        %1169 = vmatprep.subr.mxu0 %v1040
        %1170 = vmatpush1.msra.mxu0 %v1039
        %1171 = vmatprep.subr.mxu0 %v1038
        %1172 = vmatpush1.msra.mxu0 %v1037
        %1173 = vmatprep.subr.mxu0 %v1036
        %1174 = vmatpush1.msra.mxu0 %v1035
        %1175 = vmatprep.subr.mxu0 %v1034
        %1176 = vmatpush1.msra.mxu0 %v1033
        %1177 = vmatprep.subr.mxu0 %v1032
        %1178 = vmatpush1.msra.mxu0 %v1031
        %1179 = vmatprep.subr.mxu0 %v1030
        %1180 = vmatpush1.msra.mxu0 %v1029
        %1181 = vmatprep.subr.mxu0 %v1028
        %1182 = vmatpush1.msra.mxu0 %v1027
        %1183 = vmatprep.subr.mxu0 %v1026
        %1184 = vmatpush1.msra.mxu0 %v1025
        %1185 = vmatprep.subr.mxu0 %v1024
        %1186 = vmatpush1.msra.mxu0 %v1023
        %1187 = vmatprep.subr.mxu0 %v1022
        %1188 = vmatpush1.msra.mxu0 %v1021
        %1189 = vmatprep.subr.mxu0 %v1020
        %1190 = vmatpush1.msra.mxu0 %v1019
        %1191 = vmatprep.subr.mxu0 %v1018
        %1192 = vmatpush1.msra.mxu0 %v1017
        %1193 = vmatprep.subr.mxu0 0.0
        %1194 = vmatpush2.msra.mxu0 0.0
        %1195 = vmatprep.subr.mxu0 0.0
        %1196 = vmatpush2.msra.mxu0 0.0
        %1197 = vmatprep.subr.mxu0 0.0
        %1198 = vmatpush2.msra.mxu0 0.0
        %1199 = vmatprep.subr.mxu0 0.0
        %1200 = vmatpush2.msra.mxu0 0.0
        %1201 = vmatprep.subr.mxu0 0.0
        %1202 = vmatpush2.msra.mxu0 0.0
        %1203 = vmatprep.subr.mxu0 0.0
        %1204 = vmatpush2.msra.mxu0 0.0
        %1205 = vmatprep.subr.mxu0 0.0
        %1206 = vmatpush2.msra.mxu0 0.0
        %1207 = vmatprep.subr.mxu0 0.0
        %1208 = vmatpush2.msra.mxu0 0.0
        %1209 = vmatprep.subr.mxu0 0.0
        %1210 = vmatpush2.msra.mxu0 0.0
        %1211 = vmatprep.subr.mxu0 0.0
        %1212 = vmatpush2.msra.mxu0 0.0
        %1213 = vmatprep.subr.mxu0 0.0
        %1214 = vmatpush2.msra.mxu0 0.0
        %1215 = vmatprep.subr.mxu0 0.0
        %1216 = vmatpush2.msra.mxu0 0.0
        %1217 = vmatprep.subr.mxu0 0.0
        %1218 = vmatpush2.msra.mxu0 0.0
        %1219 = vmatprep.subr.mxu0 0.0
        %1220 = vmatpush2.msra.mxu0 0.0
        %1221 = vmatprep.subr.mxu0 0.0
        %1222 = vmatpush2.msra.mxu0 0.0
        %1223 = vmatprep.subr.mxu0 0.0
        %1224 = vmatpush2.msra.mxu0 0.0
        %1225 = vmatprep.mubr.f32.mxu0 0.0
        %1226 = vmatmul.mubr.f32.gmra.mxu0 %v1015
        %v1227 = vpop.f32.mrf.mxu0
        %v1228 = vadd.f32 %v1151, %v1227
        %v1229 = vpop.f32.mrf.mxu0
        %v1230 = vadd.f32 %v1153, %v1229
        %1231 = vmatprep.mubr.f32.mxu0 0.0
        %1232 = vmatmul.mubr.f32.gmra.mxu0 %v1016
        %v1233 = vpop.f32.mrf.mxu0
        %v1234 = vadd.f32 %v1157, %v1233
        %v1235 = vpop.f32.mrf.mxu0
        %v1236 = vadd.f32 %v1159, %v1235
        %1237 = vdwg.mxu0
        %v1238 = vld [vmem:[#allocation3 + $0x2] sm:$0xff]
        %v1239 = vld [vmem:[#allocation3 + $0xa] sm:$0xff]
        %s1240 = scalar_lea.vmem [#allocation6], 512
        %v1241 = vld [vmem:[%s1240] sm:$0xff]
        %v1242 = vld [vmem:[%s1240 + $0x8] sm:$0xff]
        %v1243 = vld [vmem:[%s1240 + $0x10] sm:$0xff]
        %v1244 = vld [vmem:[%s1240 + $0x18] sm:$0xff]
        %v1245 = vld [vmem:[%s1240 + $0x20] sm:$0xff]
        %v1246 = vld [vmem:[%s1240 + $0x28] sm:$0xff]
        %v1247 = vld [vmem:[%s1240 + $0x30] sm:$0xff]
        %v1248 = vld [vmem:[%s1240 + $0x38] sm:$0xff]
        %v1249 = vld [vmem:[%s1240 + $0x40] sm:$0xff]
        %v1250 = vld [vmem:[%s1240 + $0x48] sm:$0xff]
        %v1251 = vld [vmem:[%s1240 + $0x50] sm:$0xff]
        %v1252 = vld [vmem:[%s1240 + $0x58] sm:$0xff]
        %v1253 = vld [vmem:[%s1240 + $0x60] sm:$0xff]
        %v1254 = vld [vmem:[%s1240 + $0x68] sm:$0xff]
        %v1255 = vld [vmem:[%s1240 + $0x70] sm:$0xff]
        %v1256 = vld [vmem:[%s1240 + $0x78] sm:$0xff]
        %v1257 = vld [vmem:[%s1240 + $0x80] sm:$0xff]
        %v1258 = vld [vmem:[%s1240 + $0x88] sm:$0xff]
        %v1259 = vld [vmem:[%s1240 + $0x90] sm:$0xff]
        %v1260 = vld [vmem:[%s1240 + $0x98] sm:$0xff]
        %v1261 = vld [vmem:[%s1240 + $0xa0] sm:$0xff]
        %v1262 = vld [vmem:[%s1240 + $0xa8] sm:$0xff]
        %v1263 = vld [vmem:[%s1240 + $0xb0] sm:$0xff]
        %v1264 = vld [vmem:[%s1240 + $0xb8] sm:$0xff]
        %v1265 = vld [vmem:[%s1240 + $0xc0] sm:$0xff]
        %v1266 = vld [vmem:[%s1240 + $0xc8] sm:$0xff]
        %v1267 = vld [vmem:[%s1240 + $0xd0] sm:$0xff]
        %v1268 = vld [vmem:[%s1240 + $0xd8] sm:$0xff]
        %v1269 = vld [vmem:[%s1240 + $0xe0] sm:$0xff]
        %v1270 = vld [vmem:[%s1240 + $0xe8] sm:$0xff]
        %v1271 = vld [vmem:[%s1240 + $0xf0] sm:$0xff]
        %v1272 = vld [vmem:[%s1240 + $0xf8] sm:$0xff]
        %1273 = vmatprep.subr.mxu0 %v1272
        %1274 = vmatpush1.msra.mxu0 %v1271
        %1275 = vmatprep.subr.mxu0 %v1270
        %1276 = vmatpush1.msra.mxu0 %v1269
        %1277 = vmatprep.subr.mxu0 %v1268
        %1278 = vmatpush1.msra.mxu0 %v1267
        %1279 = vmatprep.subr.mxu0 %v1266
        %1280 = vmatpush1.msra.mxu0 %v1265
        %1281 = vmatprep.subr.mxu0 %v1264
        %1282 = vmatpush1.msra.mxu0 %v1263
        %1283 = vmatprep.subr.mxu0 %v1262
        %1284 = vmatpush1.msra.mxu0 %v1261
        %1285 = vmatprep.subr.mxu0 %v1260
        %1286 = vmatpush1.msra.mxu0 %v1259
        %1287 = vmatprep.subr.mxu0 %v1258
        %1288 = vmatpush1.msra.mxu0 %v1257
        %1289 = vmatprep.subr.mxu0 %v1256
        %1290 = vmatpush1.msra.mxu0 %v1255
        %1291 = vmatprep.subr.mxu0 %v1254
        %1292 = vmatpush1.msra.mxu0 %v1253
        %1293 = vmatprep.subr.mxu0 %v1252
        %1294 = vmatpush1.msra.mxu0 %v1251
        %1295 = vmatprep.subr.mxu0 %v1250
        %1296 = vmatpush1.msra.mxu0 %v1249
        %1297 = vmatprep.subr.mxu0 %v1248
        %1298 = vmatpush1.msra.mxu0 %v1247
        %1299 = vmatprep.subr.mxu0 %v1246
        %1300 = vmatpush1.msra.mxu0 %v1245
        %1301 = vmatprep.subr.mxu0 %v1244
        %1302 = vmatpush1.msra.mxu0 %v1243
        %1303 = vmatprep.subr.mxu0 %v1242
        %1304 = vmatpush1.msra.mxu0 %v1241
        %1305 = vmatprep.subr.mxu0 0.0
        %1306 = vmatpush2.msra.mxu0 0.0
        %1307 = vmatprep.subr.mxu0 0.0
        %1308 = vmatpush2.msra.mxu0 0.0
        %1309 = vmatprep.subr.mxu0 0.0
        %1310 = vmatpush2.msra.mxu0 0.0
        %1311 = vmatprep.subr.mxu0 0.0
        %1312 = vmatpush2.msra.mxu0 0.0
        %1313 = vmatprep.subr.mxu0 0.0
        %1314 = vmatpush2.msra.mxu0 0.0
        %1315 = vmatprep.subr.mxu0 0.0
        %1316 = vmatpush2.msra.mxu0 0.0
        %1317 = vmatprep.subr.mxu0 0.0
        %1318 = vmatpush2.msra.mxu0 0.0
        %1319 = vmatprep.subr.mxu0 0.0
        %1320 = vmatpush2.msra.mxu0 0.0
        %1321 = vmatprep.subr.mxu0 0.0
        %1322 = vmatpush2.msra.mxu0 0.0
        %1323 = vmatprep.subr.mxu0 0.0
        %1324 = vmatpush2.msra.mxu0 0.0
        %1325 = vmatprep.subr.mxu0 0.0
        %1326 = vmatpush2.msra.mxu0 0.0
        %1327 = vmatprep.subr.mxu0 0.0
        %1328 = vmatpush2.msra.mxu0 0.0
        %1329 = vmatprep.subr.mxu0 0.0
        %1330 = vmatpush2.msra.mxu0 0.0
        %1331 = vmatprep.subr.mxu0 0.0
        %1332 = vmatpush2.msra.mxu0 0.0
        %1333 = vmatprep.subr.mxu0 0.0
        %1334 = vmatpush2.msra.mxu0 0.0
        %1335 = vmatprep.subr.mxu0 0.0
        %1336 = vmatpush2.msra.mxu0 0.0
        %1337 = vmatprep.mubr.f32.mxu0 0.0
        %1338 = vmatmul.mubr.f32.gmra.mxu0 %v1238
        %v1339 = vpop.f32.mrf.mxu0
        %v1340 = vadd.f32 0.0, %v1339
        %v1341 = vpop.f32.mrf.mxu0
        %v1342 = vadd.f32 0.0, %v1341
        %1343 = vmatprep.mubr.f32.mxu0 0.0
        %1344 = vmatmul.mubr.f32.gmra.mxu0 %v1239
        %v1345 = vpop.f32.mrf.mxu0
        %v1346 = vadd.f32 0.0, %v1345
        %v1347 = vpop.f32.mrf.mxu0
        %v1348 = vadd.f32 0.0, %v1347
        %1349 = vdwg.mxu0
        %v1350 = vadd.f32 %v1228, %v1340
        %v1351 = vadd.f32 %v1230, %v1342
        %v1352 = vadd.f32 %v1234, %v1346
        %v1353 = vadd.f32 %v1236, %v1348
        %v1354 = vld [vmem:[#allocation3 + $0x3] sm:$0xff]
        %v1355 = vld [vmem:[#allocation3 + $0xb] sm:$0xff]
        %s1356 = scalar_lea.vmem [#allocation6], 768
        %v1357 = vld [vmem:[%s1356] sm:$0xff]
        %v1358 = vld [vmem:[%s1356 + $0x8] sm:$0xff]
        %v1359 = vld [vmem:[%s1356 + $0x10] sm:$0xff]
        %v1360 = vld [vmem:[%s1356 + $0x18] sm:$0xff]
        %v1361 = vld [vmem:[%s1356 + $0x20] sm:$0xff]
        %v1362 = vld [vmem:[%s1356 + $0x28] sm:$0xff]
        %v1363 = vld [vmem:[%s1356 + $0x30] sm:$0xff]
        %v1364 = vld [vmem:[%s1356 + $0x38] sm:$0xff]
        %v1365 = vld [vmem:[%s1356 + $0x40] sm:$0xff]
        %v1366 = vld [vmem:[%s1356 + $0x48] sm:$0xff]
        %v1367 = vld [vmem:[%s1356 + $0x50] sm:$0xff]
        %v1368 = vld [vmem:[%s1356 + $0x58] sm:$0xff]
        %v1369 = vld [vmem:[%s1356 + $0x60] sm:$0xff]
        %v1370 = vld [vmem:[%s1356 + $0x68] sm:$0xff]
        %v1371 = vld [vmem:[%s1356 + $0x70] sm:$0xff]
        %v1372 = vld [vmem:[%s1356 + $0x78] sm:$0xff]
        %v1373 = vld [vmem:[%s1356 + $0x80] sm:$0xff]
        %v1374 = vld [vmem:[%s1356 + $0x88] sm:$0xff]
        %v1375 = vld [vmem:[%s1356 + $0x90] sm:$0xff]
        %v1376 = vld [vmem:[%s1356 + $0x98] sm:$0xff]
        %v1377 = vld [vmem:[%s1356 + $0xa0] sm:$0xff]
        %v1378 = vld [vmem:[%s1356 + $0xa8] sm:$0xff]
        %v1379 = vld [vmem:[%s1356 + $0xb0] sm:$0xff]
        %v1380 = vld [vmem:[%s1356 + $0xb8] sm:$0xff]
        %v1381 = vld [vmem:[%s1356 + $0xc0] sm:$0xff]
        %v1382 = vld [vmem:[%s1356 + $0xc8] sm:$0xff]
        %v1383 = vld [vmem:[%s1356 + $0xd0] sm:$0xff]
        %v1384 = vld [vmem:[%s1356 + $0xd8] sm:$0xff]
        %v1385 = vld [vmem:[%s1356 + $0xe0] sm:$0xff]
        %v1386 = vld [vmem:[%s1356 + $0xe8] sm:$0xff]
        %v1387 = vld [vmem:[%s1356 + $0xf0] sm:$0xff]
        %v1388 = vld [vmem:[%s1356 + $0xf8] sm:$0xff]
        %1389 = vmatprep.subr.mxu0 %v1388
        %1390 = vmatpush1.msra.mxu0 %v1387
        %1391 = vmatprep.subr.mxu0 %v1386
        %1392 = vmatpush1.msra.mxu0 %v1385
        %1393 = vmatprep.subr.mxu0 %v1384
        %1394 = vmatpush1.msra.mxu0 %v1383
        %1395 = vmatprep.subr.mxu0 %v1382
        %1396 = vmatpush1.msra.mxu0 %v1381
        %1397 = vmatprep.subr.mxu0 %v1380
        %1398 = vmatpush1.msra.mxu0 %v1379
        %1399 = vmatprep.subr.mxu0 %v1378
        %1400 = vmatpush1.msra.mxu0 %v1377
        %1401 = vmatprep.subr.mxu0 %v1376
        %1402 = vmatpush1.msra.mxu0 %v1375
        %1403 = vmatprep.subr.mxu0 %v1374
        %1404 = vmatpush1.msra.mxu0 %v1373
        %1405 = vmatprep.subr.mxu0 %v1372
        %1406 = vmatpush1.msra.mxu0 %v1371
        %1407 = vmatprep.subr.mxu0 %v1370
        %1408 = vmatpush1.msra.mxu0 %v1369
        %1409 = vmatprep.subr.mxu0 %v1368
        %1410 = vmatpush1.msra.mxu0 %v1367
        %1411 = vmatprep.subr.mxu0 %v1366
        %1412 = vmatpush1.msra.mxu0 %v1365
        %1413 = vmatprep.subr.mxu0 %v1364
        %1414 = vmatpush1.msra.mxu0 %v1363
        %1415 = vmatprep.subr.mxu0 %v1362
        %1416 = vmatpush1.msra.mxu0 %v1361
        %1417 = vmatprep.subr.mxu0 %v1360
        %1418 = vmatpush1.msra.mxu0 %v1359
        %1419 = vmatprep.subr.mxu0 %v1358
        %1420 = vmatpush1.msra.mxu0 %v1357
        %1421 = vmatprep.subr.mxu0 0.0
        %1422 = vmatpush2.msra.mxu0 0.0
        %1423 = vmatprep.subr.mxu0 0.0
        %1424 = vmatpush2.msra.mxu0 0.0
        %1425 = vmatprep.subr.mxu0 0.0
        %1426 = vmatpush2.msra.mxu0 0.0
        %1427 = vmatprep.subr.mxu0 0.0
        %1428 = vmatpush2.msra.mxu0 0.0
        %1429 = vmatprep.subr.mxu0 0.0
        %1430 = vmatpush2.msra.mxu0 0.0
        %1431 = vmatprep.subr.mxu0 0.0
        %1432 = vmatpush2.msra.mxu0 0.0
        %1433 = vmatprep.subr.mxu0 0.0
        %1434 = vmatpush2.msra.mxu0 0.0
        %1435 = vmatprep.subr.mxu0 0.0
        %1436 = vmatpush2.msra.mxu0 0.0
        %1437 = vmatprep.subr.mxu0 0.0
        %1438 = vmatpush2.msra.mxu0 0.0
        %1439 = vmatprep.subr.mxu0 0.0
        %1440 = vmatpush2.msra.mxu0 0.0
        %1441 = vmatprep.subr.mxu0 0.0
        %1442 = vmatpush2.msra.mxu0 0.0
        %1443 = vmatprep.subr.mxu0 0.0
        %1444 = vmatpush2.msra.mxu0 0.0
        %1445 = vmatprep.subr.mxu0 0.0
        %1446 = vmatpush2.msra.mxu0 0.0
        %1447 = vmatprep.subr.mxu0 0.0
        %1448 = vmatpush2.msra.mxu0 0.0
        %1449 = vmatprep.subr.mxu0 0.0
        %1450 = vmatpush2.msra.mxu0 0.0
        %1451 = vmatprep.subr.mxu0 0.0
        %1452 = vmatpush2.msra.mxu0 0.0
        %1453 = vmatprep.mubr.f32.mxu0 0.0
        %1454 = vmatmul.mubr.f32.gmra.mxu0 %v1354
        %v1455 = vpop.f32.mrf.mxu0
        %v1456 = vadd.f32 0.0, %v1455
        %v1457 = vpop.f32.mrf.mxu0
        %v1458 = vadd.f32 0.0, %v1457
        %1459 = vmatprep.mubr.f32.mxu0 0.0
        %1460 = vmatmul.mubr.f32.gmra.mxu0 %v1355
        %v1461 = vpop.f32.mrf.mxu0
        %v1462 = vadd.f32 0.0, %v1461
        %v1463 = vpop.f32.mrf.mxu0
        %v1464 = vadd.f32 0.0, %v1463
        %1465 = vdwg.mxu0
        %v1466 = vadd.f32 %v1350, %v1456
        %v1467 = vadd.f32 %v1351, %v1458
        %v1468 = vadd.f32 %v1352, %v1462
        %v1469 = vadd.f32 %v1353, %v1464
        %v1470 = vld [vmem:[#allocation3 + $0x4] sm:$0xff]
        %v1471 = vld [vmem:[#allocation3 + $0xc] sm:$0xff]
        %s1472 = scalar_lea.vmem [#allocation6], 1024
        %v1473 = vld [vmem:[%s1472] sm:$0xff]
        %v1474 = vld [vmem:[%s1472 + $0x8] sm:$0xff]
        %v1475 = vld [vmem:[%s1472 + $0x10] sm:$0xff]
        %v1476 = vld [vmem:[%s1472 + $0x18] sm:$0xff]
        %v1477 = vld [vmem:[%s1472 + $0x20] sm:$0xff]
        %v1478 = vld [vmem:[%s1472 + $0x28] sm:$0xff]
        %v1479 = vld [vmem:[%s1472 + $0x30] sm:$0xff]
        %v1480 = vld [vmem:[%s1472 + $0x38] sm:$0xff]
        %v1481 = vld [vmem:[%s1472 + $0x40] sm:$0xff]
        %v1482 = vld [vmem:[%s1472 + $0x48] sm:$0xff]
        %v1483 = vld [vmem:[%s1472 + $0x50] sm:$0xff]
        %v1484 = vld [vmem:[%s1472 + $0x58] sm:$0xff]
        %v1485 = vld [vmem:[%s1472 + $0x60] sm:$0xff]
        %v1486 = vld [vmem:[%s1472 + $0x68] sm:$0xff]
        %v1487 = vld [vmem:[%s1472 + $0x70] sm:$0xff]
        %v1488 = vld [vmem:[%s1472 + $0x78] sm:$0xff]
        %v1489 = vld [vmem:[%s1472 + $0x80] sm:$0xff]
        %v1490 = vld [vmem:[%s1472 + $0x88] sm:$0xff]
        %v1491 = vld [vmem:[%s1472 + $0x90] sm:$0xff]
        %v1492 = vld [vmem:[%s1472 + $0x98] sm:$0xff]
        %v1493 = vld [vmem:[%s1472 + $0xa0] sm:$0xff]
        %v1494 = vld [vmem:[%s1472 + $0xa8] sm:$0xff]
        %v1495 = vld [vmem:[%s1472 + $0xb0] sm:$0xff]
        %v1496 = vld [vmem:[%s1472 + $0xb8] sm:$0xff]
        %v1497 = vld [vmem:[%s1472 + $0xc0] sm:$0xff]
        %v1498 = vld [vmem:[%s1472 + $0xc8] sm:$0xff]
        %v1499 = vld [vmem:[%s1472 + $0xd0] sm:$0xff]
        %v1500 = vld [vmem:[%s1472 + $0xd8] sm:$0xff]
        %v1501 = vld [vmem:[%s1472 + $0xe0] sm:$0xff]
        %v1502 = vld [vmem:[%s1472 + $0xe8] sm:$0xff]
        %v1503 = vld [vmem:[%s1472 + $0xf0] sm:$0xff]
        %v1504 = vld [vmem:[%s1472 + $0xf8] sm:$0xff]
        %1505 = vmatprep.subr.mxu0 %v1504
        %1506 = vmatpush1.msra.mxu0 %v1503
        %1507 = vmatprep.subr.mxu0 %v1502
        %1508 = vmatpush1.msra.mxu0 %v1501
        %1509 = vmatprep.subr.mxu0 %v1500
        %1510 = vmatpush1.msra.mxu0 %v1499
        %1511 = vmatprep.subr.mxu0 %v1498
        %1512 = vmatpush1.msra.mxu0 %v1497
        %1513 = vmatprep.subr.mxu0 %v1496
        %1514 = vmatpush1.msra.mxu0 %v1495
        %1515 = vmatprep.subr.mxu0 %v1494
        %1516 = vmatpush1.msra.mxu0 %v1493
        %1517 = vmatprep.subr.mxu0 %v1492
        %1518 = vmatpush1.msra.mxu0 %v1491
        %1519 = vmatprep.subr.mxu0 %v1490
        %1520 = vmatpush1.msra.mxu0 %v1489
        %1521 = vmatprep.subr.mxu0 %v1488
        %1522 = vmatpush1.msra.mxu0 %v1487
        %1523 = vmatprep.subr.mxu0 %v1486
        %1524 = vmatpush1.msra.mxu0 %v1485
        %1525 = vmatprep.subr.mxu0 %v1484
        %1526 = vmatpush1.msra.mxu0 %v1483
        %1527 = vmatprep.subr.mxu0 %v1482
        %1528 = vmatpush1.msra.mxu0 %v1481
        %1529 = vmatprep.subr.mxu0 %v1480
        %1530 = vmatpush1.msra.mxu0 %v1479
        %1531 = vmatprep.subr.mxu0 %v1478
        %1532 = vmatpush1.msra.mxu0 %v1477
        %1533 = vmatprep.subr.mxu0 %v1476
        %1534 = vmatpush1.msra.mxu0 %v1475
        %1535 = vmatprep.subr.mxu0 %v1474
        %1536 = vmatpush1.msra.mxu0 %v1473
        %1537 = vmatprep.subr.mxu0 0.0
        %1538 = vmatpush2.msra.mxu0 0.0
        %1539 = vmatprep.subr.mxu0 0.0
        %1540 = vmatpush2.msra.mxu0 0.0
        %1541 = vmatprep.subr.mxu0 0.0
        %1542 = vmatpush2.msra.mxu0 0.0
        %1543 = vmatprep.subr.mxu0 0.0
        %1544 = vmatpush2.msra.mxu0 0.0
        %1545 = vmatprep.subr.mxu0 0.0
        %1546 = vmatpush2.msra.mxu0 0.0
        %1547 = vmatprep.subr.mxu0 0.0
        %1548 = vmatpush2.msra.mxu0 0.0
        %1549 = vmatprep.subr.mxu0 0.0
        %1550 = vmatpush2.msra.mxu0 0.0
        %1551 = vmatprep.subr.mxu0 0.0
        %1552 = vmatpush2.msra.mxu0 0.0
        %1553 = vmatprep.subr.mxu0 0.0
        %1554 = vmatpush2.msra.mxu0 0.0
        %1555 = vmatprep.subr.mxu0 0.0
        %1556 = vmatpush2.msra.mxu0 0.0
        %1557 = vmatprep.subr.mxu0 0.0
        %1558 = vmatpush2.msra.mxu0 0.0
        %1559 = vmatprep.subr.mxu0 0.0
        %1560 = vmatpush2.msra.mxu0 0.0
        %1561 = vmatprep.subr.mxu0 0.0
        %1562 = vmatpush2.msra.mxu0 0.0
        %1563 = vmatprep.subr.mxu0 0.0
        %1564 = vmatpush2.msra.mxu0 0.0
        %1565 = vmatprep.subr.mxu0 0.0
        %1566 = vmatpush2.msra.mxu0 0.0
        %1567 = vmatprep.subr.mxu0 0.0
        %1568 = vmatpush2.msra.mxu0 0.0
        %1569 = vmatprep.mubr.f32.mxu0 0.0
        %1570 = vmatmul.mubr.f32.gmra.mxu0 %v1470
        %v1571 = vpop.f32.mrf.mxu0
        %v1572 = vadd.f32 0.0, %v1571
        %v1573 = vpop.f32.mrf.mxu0
        %v1574 = vadd.f32 0.0, %v1573
        %1575 = vmatprep.mubr.f32.mxu0 0.0
        %1576 = vmatmul.mubr.f32.gmra.mxu0 %v1471
        %v1577 = vpop.f32.mrf.mxu0
        %v1578 = vadd.f32 0.0, %v1577
        %v1579 = vpop.f32.mrf.mxu0
        %v1580 = vadd.f32 0.0, %v1579
        %1581 = vdwg.mxu0
        %v1582 = vadd.f32 %v1466, %v1572
        %v1583 = vadd.f32 %v1467, %v1574
        %v1584 = vadd.f32 %v1468, %v1578
        %v1585 = vadd.f32 %v1469, %v1580
        %v1586 = vld [vmem:[%s4] ss:$2 sm:$0x3]
        %v1588 = vlaneseq
        %v1589 = vshrl.u32 %v1588, 7
        %v1590 = vsub.s32 0, %v1589
        %v1591 = vrot.slane %v1586, %v1590
        %v1592 = vlaneseq
        %v1593 = vshrl.u32 %v1592, 7
        %v1594 = vsub.s32 1, %v1593
        %v1595 = vrot.slane %v1586, %v1594
        %v1598 = vmul.f32 %v1582, %v1591
        %v1599 = vmul.f32 %v1583, %v1595
        %v1600 = vmul.f32 %v1584, %v1591
        %v1601 = vmul.f32 %v1585, %v1595
        %s1602 = scalar_lea.vmem %s4, 1
        %v1603 = vld [vmem:[%s1602] ss:$2 sm:$0x3]
        %v1605 = vlaneseq
        %v1606 = vshrl.u32 %v1605, 7
        %v1607 = vsub.s32 0, %v1606
        %v1608 = vrot.slane %v1603, %v1607
        %v1609 = vlaneseq
        %v1610 = vshrl.u32 %v1609, 7
        %v1611 = vsub.s32 1, %v1610
        %v1612 = vrot.slane %v1603, %v1611
        %v1615 = vadd.f32 %v1598, %v1608
        %v1616 = vadd.f32 %v1599, %v1612
        %v1617 = vadd.f32 %v1600, %v1608
        %v1618 = vadd.f32 %v1601, %v1612
        %v1619 = vmax.f32 %v1615, 0.0
        %v1620 = vmax.f32 %v1616, 0.0
        %v1621 = vmax.f32 %v1617, 0.0
        %v1622 = vmax.f32 %v1618, 0.0
        %v1623 = vlaneseq
        %vm1624 = vcmp.ge.s32.totalorder %v1623, 0
        %vm1625 = vcmp.lt.s32.totalorder %v1623, 256
        %vm1626 = vmand %vm1624, %vm1625
        %1627 = vst.msk [vmem:[#allocation4] ss:$8 sm:$0x3] %vm1626, 0.0
        %1628 = vst.msk [vmem:[#allocation4] ss:$8 sm:$0x0] %vm1626, 0.0
        %s1629 = scalar_lea.vmem [#allocation4], 33
        %1630 = vst.msk [vmem:[%s1629] ss:$8 sm:$0x3] %vm1626, 0.0
        %1631 = vst.msk [vmem:[%s1629] ss:$8 sm:$0x0] %vm1626, 0.0
        %vm1636 = vcmask 1040384
        %v1637 = vrot.slane %v1619, 7
        %v1638 = vrot.slane %v1620, 7
        %v1639 = vrot.slane %v1621, 7
        %v1640 = vsel %vm1636, %v1637, %v1639
        %v1641 = vrot.slane %v1622, 7
        %v1642 = vsel %vm1636, %v1638, %v1641
        %1649 = vst [vmem:[#allocation4] sm:$0xfe] %v1637
        %1650 = vst [vmem:[#allocation4 + $0x8] sm:$0xfe] %v1638
        %1651 = vst [vmem:[#allocation4 + $0x10] sm:$0xff] %v1640
        %1652 = vst [vmem:[#allocation4 + $0x18] sm:$0xff] %v1642
        %1653 = vst [vmem:[#allocation4 + $0x20] sm:$0x1] %v1639
        %1654 = vst [vmem:[#allocation4 + $0x28] sm:$0x1] %v1641
        %v1655 = vld [vmem:[#allocation4] sm:$0xff]
        %v1656 = vld [vmem:[#allocation4 + $0x8] sm:$0xff]
        %v1657 = vld [vmem:[#allocation4 + $0x10] sm:$0xff]
        %v1658 = vld [vmem:[#allocation4 + $0x18] sm:$0xff]
        %v1659 = vld [vmem:[#allocation8] sm:$0xff]
        %v1660 = vld [vmem:[#allocation8 + $0x8] sm:$0xff]
        %v1661 = vld [vmem:[#allocation8 + $0x10] sm:$0xff]
        %v1662 = vld [vmem:[#allocation8 + $0x18] sm:$0xff]
        %v1663 = vld [vmem:[#allocation8 + $0x20] sm:$0xff]
        %v1664 = vld [vmem:[#allocation8 + $0x28] sm:$0xff]
        %v1665 = vld [vmem:[#allocation8 + $0x30] sm:$0xff]
        %v1666 = vld [vmem:[#allocation8 + $0x38] sm:$0xff]
        %v1667 = vld [vmem:[#allocation8 + $0x40] sm:$0xff]
        %v1668 = vld [vmem:[#allocation8 + $0x48] sm:$0xff]
        %v1669 = vld [vmem:[#allocation8 + $0x50] sm:$0xff]
        %v1670 = vld [vmem:[#allocation8 + $0x58] sm:$0xff]
        %v1671 = vld [vmem:[#allocation8 + $0x60] sm:$0xff]
        %v1672 = vld [vmem:[#allocation8 + $0x68] sm:$0xff]
        %v1673 = vld [vmem:[#allocation8 + $0x70] sm:$0xff]
        %v1674 = vld [vmem:[#allocation8 + $0x78] sm:$0xff]
        %v1675 = vld [vmem:[#allocation8 + $0x80] sm:$0xff]
        %v1676 = vld [vmem:[#allocation8 + $0x88] sm:$0xff]
        %v1677 = vld [vmem:[#allocation8 + $0x90] sm:$0xff]
        %v1678 = vld [vmem:[#allocation8 + $0x98] sm:$0xff]
        %v1679 = vld [vmem:[#allocation8 + $0xa0] sm:$0xff]
        %v1680 = vld [vmem:[#allocation8 + $0xa8] sm:$0xff]
        %v1681 = vld [vmem:[#allocation8 + $0xb0] sm:$0xff]
        %v1682 = vld [vmem:[#allocation8 + $0xb8] sm:$0xff]
        %v1683 = vld [vmem:[#allocation8 + $0xc0] sm:$0xff]
        %v1684 = vld [vmem:[#allocation8 + $0xc8] sm:$0xff]
        %v1685 = vld [vmem:[#allocation8 + $0xd0] sm:$0xff]
        %v1686 = vld [vmem:[#allocation8 + $0xd8] sm:$0xff]
        %v1687 = vld [vmem:[#allocation8 + $0xe0] sm:$0xff]
        %v1688 = vld [vmem:[#allocation8 + $0xe8] sm:$0xff]
        %v1689 = vld [vmem:[#allocation8 + $0xf0] sm:$0xff]
        %v1690 = vld [vmem:[#allocation8 + $0xf8] sm:$0xff]
        %v1691 = vld [vmem:[#allocation4] sm:$0xfe]
        %v1692 = vld [vmem:[#allocation4 + $0x8] sm:$0xfe]
        %v1693 = vld [vmem:[#allocation4 + $0x20] sm:$0x1]
        %v1694 = vld [vmem:[#allocation4 + $0x28] sm:$0x1]
        %s1695 = scalar_lea.vmem [#allocation8], 256
        %v1696 = vld [vmem:[%s1695] sm:$0xff]
        %v1697 = vld [vmem:[%s1695 + $0x8] sm:$0xff]
        %v1698 = vld [vmem:[%s1695 + $0x10] sm:$0xff]
        %v1699 = vld [vmem:[%s1695 + $0x18] sm:$0xff]
        %v1700 = vld [vmem:[%s1695 + $0x20] sm:$0xff]
        %v1701 = vld [vmem:[%s1695 + $0x28] sm:$0xff]
        %v1702 = vld [vmem:[%s1695 + $0x30] sm:$0xff]
        %v1703 = vld [vmem:[%s1695 + $0x38] sm:$0xff]
        %v1704 = vld [vmem:[%s1695 + $0x40] sm:$0xff]
        %v1705 = vld [vmem:[%s1695 + $0x48] sm:$0xff]
        %v1706 = vld [vmem:[%s1695 + $0x50] sm:$0xff]
        %v1707 = vld [vmem:[%s1695 + $0x58] sm:$0xff]
        %v1708 = vld [vmem:[%s1695 + $0x60] sm:$0xff]
        %v1709 = vld [vmem:[%s1695 + $0x68] sm:$0xff]
        %v1710 = vld [vmem:[%s1695 + $0x70] sm:$0xff]
        %v1711 = vld [vmem:[%s1695 + $0x78] sm:$0xff]
        %v1712 = vld [vmem:[%s1695 + $0x80] sm:$0xff]
        %v1713 = vld [vmem:[%s1695 + $0x88] sm:$0xff]
        %v1714 = vld [vmem:[%s1695 + $0x90] sm:$0xff]
        %v1715 = vld [vmem:[%s1695 + $0x98] sm:$0xff]
        %v1716 = vld [vmem:[%s1695 + $0xa0] sm:$0xff]
        %v1717 = vld [vmem:[%s1695 + $0xa8] sm:$0xff]
        %v1718 = vld [vmem:[%s1695 + $0xb0] sm:$0xff]
        %v1719 = vld [vmem:[%s1695 + $0xb8] sm:$0xff]
        %v1720 = vld [vmem:[%s1695 + $0xc0] sm:$0xff]
        %v1721 = vld [vmem:[%s1695 + $0xc8] sm:$0xff]
        %v1722 = vld [vmem:[%s1695 + $0xd0] sm:$0xff]
        %v1723 = vld [vmem:[%s1695 + $0xd8] sm:$0xff]
        %v1724 = vld [vmem:[%s1695 + $0xe0] sm:$0xff]
        %v1725 = vld [vmem:[%s1695 + $0xe8] sm:$0xff]
        %v1726 = vld [vmem:[%s1695 + $0xf0] sm:$0xff]
        %v1727 = vld [vmem:[%s1695 + $0xf8] sm:$0xff]
        %vm1734 = vcmask 1046528
        %v1735 = vrot.slane %v1691, 1
        %v1736 = vrot.slane %v1657, 1
        %v1737 = vsel %vm1734, %v1735, %v1736
        %v1738 = vrot.slane %v1692, 1
        %v1739 = vrot.slane %v1658, 1
        %v1740 = vsel %vm1734, %v1738, %v1739
        %v1741 = vrot.slane %v1693, 1
        %v1742 = vsel %vm1734, %v1736, %v1741
        %v1743 = vrot.slane %v1694, 1
        %v1744 = vsel %vm1734, %v1739, %v1743
        %1749 = vmatprep.subr.mxu0 0.0
        %1750 = vmatpush1.msra.mxu0 %v1711
        %1751 = vmatprep.subr.mxu0 0.0
        %1752 = vmatpush1.msra.mxu0 %v1710
        %1753 = vmatprep.subr.mxu0 0.0
        %1754 = vmatpush1.msra.mxu0 %v1709
        %1755 = vmatprep.subr.mxu0 0.0
        %1756 = vmatpush1.msra.mxu0 %v1708
        %1757 = vmatprep.subr.mxu0 0.0
        %1758 = vmatpush1.msra.mxu0 %v1707
        %1759 = vmatprep.subr.mxu0 0.0
        %1760 = vmatpush1.msra.mxu0 %v1706
        %1761 = vmatprep.subr.mxu0 0.0
        %1762 = vmatpush1.msra.mxu0 %v1705
        %1763 = vmatprep.subr.mxu0 0.0
        %1764 = vmatpush1.msra.mxu0 %v1704
        %1765 = vmatprep.subr.mxu0 0.0
        %1766 = vmatpush1.msra.mxu0 %v1703
        %1767 = vmatprep.subr.mxu0 0.0
        %1768 = vmatpush1.msra.mxu0 %v1702
        %1769 = vmatprep.subr.mxu0 0.0
        %1770 = vmatpush1.msra.mxu0 %v1701
        %1771 = vmatprep.subr.mxu0 0.0
        %1772 = vmatpush1.msra.mxu0 %v1700
        %1773 = vmatprep.subr.mxu0 0.0
        %1774 = vmatpush1.msra.mxu0 %v1699
        %1775 = vmatprep.subr.mxu0 0.0
        %1776 = vmatpush1.msra.mxu0 %v1698
        %1777 = vmatprep.subr.mxu0 0.0
        %1778 = vmatpush1.msra.mxu0 %v1697
        %1779 = vmatprep.subr.mxu0 0.0
        %1780 = vmatpush1.msra.mxu0 %v1696
        %1781 = vmatprep.subr.mxu0 0.0
        %1782 = vmatpush2.msra.mxu0 %v1727
        %1783 = vmatprep.subr.mxu0 0.0
        %1784 = vmatpush2.msra.mxu0 %v1726
        %1785 = vmatprep.subr.mxu0 0.0
        %1786 = vmatpush2.msra.mxu0 %v1725
        %1787 = vmatprep.subr.mxu0 0.0
        %1788 = vmatpush2.msra.mxu0 %v1724
        %1789 = vmatprep.subr.mxu0 0.0
        %1790 = vmatpush2.msra.mxu0 %v1723
        %1791 = vmatprep.subr.mxu0 0.0
        %1792 = vmatpush2.msra.mxu0 %v1722
        %1793 = vmatprep.subr.mxu0 0.0
        %1794 = vmatpush2.msra.mxu0 %v1721
        %1795 = vmatprep.subr.mxu0 0.0
        %1796 = vmatpush2.msra.mxu0 %v1720
        %1797 = vmatprep.subr.mxu0 0.0
        %1798 = vmatpush2.msra.mxu0 %v1719
        %1799 = vmatprep.subr.mxu0 0.0
        %1800 = vmatpush2.msra.mxu0 %v1718
        %1801 = vmatprep.subr.mxu0 0.0
        %1802 = vmatpush2.msra.mxu0 %v1717
        %1803 = vmatprep.subr.mxu0 0.0
        %1804 = vmatpush2.msra.mxu0 %v1716
        %1805 = vmatprep.subr.mxu0 0.0
        %1806 = vmatpush2.msra.mxu0 %v1715
        %1807 = vmatprep.subr.mxu0 0.0
        %1808 = vmatpush2.msra.mxu0 %v1714
        %1809 = vmatprep.subr.mxu0 0.0
        %1810 = vmatpush2.msra.mxu0 %v1713
        %1811 = vmatprep.subr.mxu0 0.0
        %1812 = vmatpush2.msra.mxu0 %v1712
        %1813 = vmatprep.mubr.f32.mxu0 %v1740
        %1814 = vmatmul.mubr.f32.gmra.mxu0 %v1737
        %v1815 = vpop.f32.mrf.mxu0
        %v1816 = vadd.f32 0.0, %v1815
        %v1817 = vpop.f32.mrf.mxu0
        %1818 = vmatprep.mubr.f32.mxu0 %v1744
        %1819 = vmatmul.mubr.f32.gmra.mxu0 %v1742
        %v1820 = vpop.f32.mrf.mxu0
        %v1821 = vadd.f32 0.0, %v1820
        %v1822 = vpop.f32.mrf.mxu0
        %1823 = vdwg.mxu0
        %1824 = vmatprep.subr.mxu0 0.0
        %1825 = vmatpush1.msra.mxu0 %v1674
        %1826 = vmatprep.subr.mxu0 0.0
        %1827 = vmatpush1.msra.mxu0 %v1673
        %1828 = vmatprep.subr.mxu0 0.0
        %1829 = vmatpush1.msra.mxu0 %v1672
        %1830 = vmatprep.subr.mxu0 0.0
        %1831 = vmatpush1.msra.mxu0 %v1671
        %1832 = vmatprep.subr.mxu0 0.0
        %1833 = vmatpush1.msra.mxu0 %v1670
        %1834 = vmatprep.subr.mxu0 0.0
        %1835 = vmatpush1.msra.mxu0 %v1669
        %1836 = vmatprep.subr.mxu0 0.0
        %1837 = vmatpush1.msra.mxu0 %v1668
        %1838 = vmatprep.subr.mxu0 0.0
        %1839 = vmatpush1.msra.mxu0 %v1667
        %1840 = vmatprep.subr.mxu0 0.0
        %1841 = vmatpush1.msra.mxu0 %v1666
        %1842 = vmatprep.subr.mxu0 0.0
        %1843 = vmatpush1.msra.mxu0 %v1665
        %1844 = vmatprep.subr.mxu0 0.0
        %1845 = vmatpush1.msra.mxu0 %v1664
        %1846 = vmatprep.subr.mxu0 0.0
        %1847 = vmatpush1.msra.mxu0 %v1663
        %1848 = vmatprep.subr.mxu0 0.0
        %1849 = vmatpush1.msra.mxu0 %v1662
        %1850 = vmatprep.subr.mxu0 0.0
        %1851 = vmatpush1.msra.mxu0 %v1661
        %1852 = vmatprep.subr.mxu0 0.0
        %1853 = vmatpush1.msra.mxu0 %v1660
        %1854 = vmatprep.subr.mxu0 0.0
        %1855 = vmatpush1.msra.mxu0 %v1659
        %1856 = vmatprep.subr.mxu0 0.0
        %1857 = vmatpush2.msra.mxu0 %v1690
        %1858 = vmatprep.subr.mxu0 0.0
        %1859 = vmatpush2.msra.mxu0 %v1689
        %1860 = vmatprep.subr.mxu0 0.0
        %1861 = vmatpush2.msra.mxu0 %v1688
        %1862 = vmatprep.subr.mxu0 0.0
        %1863 = vmatpush2.msra.mxu0 %v1687
        %1864 = vmatprep.subr.mxu0 0.0
        %1865 = vmatpush2.msra.mxu0 %v1686
        %1866 = vmatprep.subr.mxu0 0.0
        %1867 = vmatpush2.msra.mxu0 %v1685
        %1868 = vmatprep.subr.mxu0 0.0
        %1869 = vmatpush2.msra.mxu0 %v1684
        %1870 = vmatprep.subr.mxu0 0.0
        %1871 = vmatpush2.msra.mxu0 %v1683
        %1872 = vmatprep.subr.mxu0 0.0
        %1873 = vmatpush2.msra.mxu0 %v1682
        %1874 = vmatprep.subr.mxu0 0.0
        %1875 = vmatpush2.msra.mxu0 %v1681
        %1876 = vmatprep.subr.mxu0 0.0
        %1877 = vmatpush2.msra.mxu0 %v1680
        %1878 = vmatprep.subr.mxu0 0.0
        %1879 = vmatpush2.msra.mxu0 %v1679
        %1880 = vmatprep.subr.mxu0 0.0
        %1881 = vmatpush2.msra.mxu0 %v1678
        %1882 = vmatprep.subr.mxu0 0.0
        %1883 = vmatpush2.msra.mxu0 %v1677
        %1884 = vmatprep.subr.mxu0 0.0
        %1885 = vmatpush2.msra.mxu0 %v1676
        %1886 = vmatprep.subr.mxu0 0.0
        %1887 = vmatpush2.msra.mxu0 %v1675
        %1888 = vmatprep.mubr.f32.mxu0 %v1656
        %1889 = vmatmul.mubr.f32.gmra.mxu0 %v1655
        %v1890 = vpop.f32.mrf.mxu0
        %v1891 = vadd.f32 %v1816, %v1890
        %v1892 = vpop.f32.mrf.mxu0
        %1893 = vmatprep.mubr.f32.mxu0 %v1658
        %1894 = vmatmul.mubr.f32.gmra.mxu0 %v1657
        %v1895 = vpop.f32.mrf.mxu0
        %v1896 = vadd.f32 %v1821, %v1895
        %v1897 = vpop.f32.mrf.mxu0
        %1898 = vdwg.mxu0
        %v1899 = vld [vmem:[#allocation4] sm:$0xfc]
        %v1900 = vld [vmem:[#allocation4 + $0x8] sm:$0xfc]
        %v1901 = vld [vmem:[#allocation4 + $0x20] sm:$0x3]
        %v1902 = vld [vmem:[#allocation4 + $0x28] sm:$0x3]
        %s1903 = scalar_lea.vmem [#allocation8], 512
        %v1904 = vld [vmem:[%s1903] sm:$0xff]
        %v1905 = vld [vmem:[%s1903 + $0x8] sm:$0xff]
        %v1906 = vld [vmem:[%s1903 + $0x10] sm:$0xff]
        %v1907 = vld [vmem:[%s1903 + $0x18] sm:$0xff]
        %v1908 = vld [vmem:[%s1903 + $0x20] sm:$0xff]
        %v1909 = vld [vmem:[%s1903 + $0x28] sm:$0xff]
        %v1910 = vld [vmem:[%s1903 + $0x30] sm:$0xff]
        %v1911 = vld [vmem:[%s1903 + $0x38] sm:$0xff]
        %v1912 = vld [vmem:[%s1903 + $0x40] sm:$0xff]
        %v1913 = vld [vmem:[%s1903 + $0x48] sm:$0xff]
        %v1914 = vld [vmem:[%s1903 + $0x50] sm:$0xff]
        %v1915 = vld [vmem:[%s1903 + $0x58] sm:$0xff]
        %v1916 = vld [vmem:[%s1903 + $0x60] sm:$0xff]
        %v1917 = vld [vmem:[%s1903 + $0x68] sm:$0xff]
        %v1918 = vld [vmem:[%s1903 + $0x70] sm:$0xff]
        %v1919 = vld [vmem:[%s1903 + $0x78] sm:$0xff]
        %v1920 = vld [vmem:[%s1903 + $0x80] sm:$0xff]
        %v1921 = vld [vmem:[%s1903 + $0x88] sm:$0xff]
        %v1922 = vld [vmem:[%s1903 + $0x90] sm:$0xff]
        %v1923 = vld [vmem:[%s1903 + $0x98] sm:$0xff]
        %v1924 = vld [vmem:[%s1903 + $0xa0] sm:$0xff]
        %v1925 = vld [vmem:[%s1903 + $0xa8] sm:$0xff]
        %v1926 = vld [vmem:[%s1903 + $0xb0] sm:$0xff]
        %v1927 = vld [vmem:[%s1903 + $0xb8] sm:$0xff]
        %v1928 = vld [vmem:[%s1903 + $0xc0] sm:$0xff]
        %v1929 = vld [vmem:[%s1903 + $0xc8] sm:$0xff]
        %v1930 = vld [vmem:[%s1903 + $0xd0] sm:$0xff]
        %v1931 = vld [vmem:[%s1903 + $0xd8] sm:$0xff]
        %v1932 = vld [vmem:[%s1903 + $0xe0] sm:$0xff]
        %v1933 = vld [vmem:[%s1903 + $0xe8] sm:$0xff]
        %v1934 = vld [vmem:[%s1903 + $0xf0] sm:$0xff]
        %v1935 = vld [vmem:[%s1903 + $0xf8] sm:$0xff]
        %vm1940 = vcmask 1045504
        %v1941 = vrot.slane %v1899, 2
        %v1942 = vrot.slane %v1657, 2
        %v1943 = vsel %vm1940, %v1941, %v1942
        %v1944 = vrot.slane %v1900, 2
        %v1945 = vrot.slane %v1658, 2
        %v1946 = vsel %vm1940, %v1944, %v1945
        %v1947 = vrot.slane %v1901, 2
        %v1948 = vsel %vm1940, %v1942, %v1947
        %v1949 = vrot.slane %v1902, 2
        %v1950 = vsel %vm1940, %v1945, %v1949
        %1955 = vmatprep.subr.mxu0 0.0
        %1956 = vmatpush1.msra.mxu0 %v1919
        %1957 = vmatprep.subr.mxu0 0.0
        %1958 = vmatpush1.msra.mxu0 %v1918
        %1959 = vmatprep.subr.mxu0 0.0
        %1960 = vmatpush1.msra.mxu0 %v1917
        %1961 = vmatprep.subr.mxu0 0.0
        %1962 = vmatpush1.msra.mxu0 %v1916
        %1963 = vmatprep.subr.mxu0 0.0
        %1964 = vmatpush1.msra.mxu0 %v1915
        %1965 = vmatprep.subr.mxu0 0.0
        %1966 = vmatpush1.msra.mxu0 %v1914
        %1967 = vmatprep.subr.mxu0 0.0
        %1968 = vmatpush1.msra.mxu0 %v1913
        %1969 = vmatprep.subr.mxu0 0.0
        %1970 = vmatpush1.msra.mxu0 %v1912
        %1971 = vmatprep.subr.mxu0 0.0
        %1972 = vmatpush1.msra.mxu0 %v1911
        %1973 = vmatprep.subr.mxu0 0.0
        %1974 = vmatpush1.msra.mxu0 %v1910
        %1975 = vmatprep.subr.mxu0 0.0
        %1976 = vmatpush1.msra.mxu0 %v1909
        %1977 = vmatprep.subr.mxu0 0.0
        %1978 = vmatpush1.msra.mxu0 %v1908
        %1979 = vmatprep.subr.mxu0 0.0
        %1980 = vmatpush1.msra.mxu0 %v1907
        %1981 = vmatprep.subr.mxu0 0.0
        %1982 = vmatpush1.msra.mxu0 %v1906
        %1983 = vmatprep.subr.mxu0 0.0
        %1984 = vmatpush1.msra.mxu0 %v1905
        %1985 = vmatprep.subr.mxu0 0.0
        %1986 = vmatpush1.msra.mxu0 %v1904
        %1987 = vmatprep.subr.mxu0 0.0
        %1988 = vmatpush2.msra.mxu0 %v1935
        %1989 = vmatprep.subr.mxu0 0.0
        %1990 = vmatpush2.msra.mxu0 %v1934
        %1991 = vmatprep.subr.mxu0 0.0
        %1992 = vmatpush2.msra.mxu0 %v1933
        %1993 = vmatprep.subr.mxu0 0.0
        %1994 = vmatpush2.msra.mxu0 %v1932
        %1995 = vmatprep.subr.mxu0 0.0
        %1996 = vmatpush2.msra.mxu0 %v1931
        %1997 = vmatprep.subr.mxu0 0.0
        %1998 = vmatpush2.msra.mxu0 %v1930
        %1999 = vmatprep.subr.mxu0 0.0
        %2000 = vmatpush2.msra.mxu0 %v1929
        %2001 = vmatprep.subr.mxu0 0.0
        %2002 = vmatpush2.msra.mxu0 %v1928
        %2003 = vmatprep.subr.mxu0 0.0
        %2004 = vmatpush2.msra.mxu0 %v1927
        %2005 = vmatprep.subr.mxu0 0.0
        %2006 = vmatpush2.msra.mxu0 %v1926
        %2007 = vmatprep.subr.mxu0 0.0
        %2008 = vmatpush2.msra.mxu0 %v1925
        %2009 = vmatprep.subr.mxu0 0.0
        %2010 = vmatpush2.msra.mxu0 %v1924
        %2011 = vmatprep.subr.mxu0 0.0
        %2012 = vmatpush2.msra.mxu0 %v1923
        %2013 = vmatprep.subr.mxu0 0.0
        %2014 = vmatpush2.msra.mxu0 %v1922
        %2015 = vmatprep.subr.mxu0 0.0
        %2016 = vmatpush2.msra.mxu0 %v1921
        %2017 = vmatprep.subr.mxu0 0.0
        %2018 = vmatpush2.msra.mxu0 %v1920
        %2019 = vmatprep.mubr.f32.mxu0 %v1946
        %2020 = vmatmul.mubr.f32.gmra.mxu0 %v1943
        %v2021 = vpop.f32.mrf.mxu0
        %v2022 = vadd.f32 0.0, %v2021
        %v2023 = vpop.f32.mrf.mxu0
        %2024 = vmatprep.mubr.f32.mxu0 %v1950
        %2025 = vmatmul.mubr.f32.gmra.mxu0 %v1948
        %v2026 = vpop.f32.mrf.mxu0
        %v2027 = vadd.f32 0.0, %v2026
        %v2028 = vpop.f32.mrf.mxu0
        %2029 = vdwg.mxu0
        %v2030 = vadd.f32 %v1891, %v2022
        %v2031 = vadd.f32 %v1896, %v2027
        %v2032 = vld [vmem:[%s6] sm:$0x1]
        %v2033 = vlaneseq
        %v2034 = vshrl.u32 %v2033, 7
        %v2035 = vsub.s32 0, %v2034
        %v2036 = vrot.slane %v2032, %v2035
        %v2037 = vmul.f32 %v2030, %v2036
        %v2038 = vmul.f32 %v2031, %v2036
        %v2039 = vld [vmem:[%s6 + $0x1] sm:$0x1]
        %v2040 = vlaneseq
        %v2041 = vshrl.u32 %v2040, 7
        %v2042 = vsub.s32 0, %v2041
        %v2043 = vrot.slane %v2039, %v2042
        %v2044 = vadd.f32 %v2037, %v2043
        %v2045 = vadd.f32 %v2038, %v2043
        %v2046 = vmax.f32 %v2044, 0.0
        %v2047 = vmax.f32 %v2045, 0.0
        %v2048 = vadd.f32 %v2046, %v2047
        %v2049 = vrot.slane %v2048, 4
        %v2050 = vadd.f32 %v2048, %v2049
        %v2051 = vrot.slane %v2050, 2
        %v2052 = vadd.f32 %v2050, %v2051
        %v2053 = vrot.slane %v2052, 1
        %v2054 = vadd.f32 %v2052, %v2053
        %v2055 = vrcp.pop 16.0
        %v2056 = vmul.f32 %v2054, %v2055
        %v2057 = vld [vmem:[%s7] sm:$0xff]
        %v2058 = vld [vmem:[%s7 + $0x8] sm:$0xff]
        %v2059 = vld [vmem:[%s7 + $0x10] sm:$0xff]
        %v2060 = vld [vmem:[%s7 + $0x18] sm:$0xff]
        %v2061 = vld [vmem:[%s7 + $0x20] sm:$0xff]
        %v2062 = vld [vmem:[%s7 + $0x28] sm:$0xff]
        %v2063 = vld [vmem:[%s7 + $0x30] sm:$0xff]
        %v2064 = vld [vmem:[%s7 + $0x38] sm:$0xff]
        %v2065 = vld [vmem:[%s7 + $0x40] sm:$0xff]
        %v2066 = vld [vmem:[%s7 + $0x48] sm:$0xff]
        %v2067 = vld [vmem:[%s7 + $0x50] sm:$0xff]
        %v2068 = vld [vmem:[%s7 + $0x58] sm:$0xff]
        %v2069 = vld [vmem:[%s7 + $0x60] sm:$0xff]
        %v2070 = vld [vmem:[%s7 + $0x68] sm:$0xff]
        %v2071 = vld [vmem:[%s7 + $0x70] sm:$0xff]
        %v2072 = vld [vmem:[%s7 + $0x78] sm:$0xff]
        %v2073 = vld [vmem:[#allocation5] sm:$0x1]
        %2074 = vmatprep.subr.mxu0 0.0
        %2075 = vmatpush1.msra.mxu0 %v2072
        %2076 = vmatprep.subr.mxu0 0.0
        %2077 = vmatpush1.msra.mxu0 %v2071
        %2078 = vmatprep.subr.mxu0 0.0
        %2079 = vmatpush1.msra.mxu0 %v2070
        %2080 = vmatprep.subr.mxu0 0.0
        %2081 = vmatpush1.msra.mxu0 %v2069
        %2082 = vmatprep.subr.mxu0 0.0
        %2083 = vmatpush1.msra.mxu0 %v2068
        %2084 = vmatprep.subr.mxu0 0.0
        %2085 = vmatpush1.msra.mxu0 %v2067
        %2086 = vmatprep.subr.mxu0 0.0
        %2087 = vmatpush1.msra.mxu0 %v2066
        %2088 = vmatprep.subr.mxu0 0.0
        %2089 = vmatpush1.msra.mxu0 %v2065
        %2090 = vmatprep.subr.mxu0 0.0
        %2091 = vmatpush1.msra.mxu0 %v2064
        %2092 = vmatprep.subr.mxu0 0.0
        %2093 = vmatpush1.msra.mxu0 %v2063
        %2094 = vmatprep.subr.mxu0 0.0
        %2095 = vmatpush1.msra.mxu0 %v2062
        %2096 = vmatprep.subr.mxu0 0.0
        %2097 = vmatpush1.msra.mxu0 %v2061
        %2098 = vmatprep.subr.mxu0 0.0
        %2099 = vmatpush1.msra.mxu0 %v2060
        %2100 = vmatprep.subr.mxu0 0.0
        %2101 = vmatpush1.msra.mxu0 %v2059
        %2102 = vmatprep.subr.mxu0 0.0
        %2103 = vmatpush1.msra.mxu0 %v2058
        %2104 = vmatprep.subr.mxu0 0.0
        %2105 = vmatpush1.msra.mxu0 %v2057
        %2106 = vmatprep.subr.mxu0 0.0
        %2107 = vmatpush2.msra.mxu0 0.0
        %2108 = vmatprep.subr.mxu0 0.0
        %2109 = vmatpush2.msra.mxu0 0.0
        %2110 = vmatprep.subr.mxu0 0.0
        %2111 = vmatpush2.msra.mxu0 0.0
        %2112 = vmatprep.subr.mxu0 0.0
        %2113 = vmatpush2.msra.mxu0 0.0
        %2114 = vmatprep.subr.mxu0 0.0
        %2115 = vmatpush2.msra.mxu0 0.0
        %2116 = vmatprep.subr.mxu0 0.0
        %2117 = vmatpush2.msra.mxu0 0.0
        %2118 = vmatprep.subr.mxu0 0.0
        %2119 = vmatpush2.msra.mxu0 0.0
        %2120 = vmatprep.subr.mxu0 0.0
        %2121 = vmatpush2.msra.mxu0 0.0
        %2122 = vmatprep.subr.mxu0 0.0
        %2123 = vmatpush2.msra.mxu0 0.0
        %2124 = vmatprep.subr.mxu0 0.0
        %2125 = vmatpush2.msra.mxu0 0.0
        %2126 = vmatprep.subr.mxu0 0.0
        %2127 = vmatpush2.msra.mxu0 0.0
        %2128 = vmatprep.subr.mxu0 0.0
        %2129 = vmatpush2.msra.mxu0 0.0
        %2130 = vmatprep.subr.mxu0 0.0
        %2131 = vmatpush2.msra.mxu0 0.0
        %2132 = vmatprep.subr.mxu0 0.0
        %2133 = vmatpush2.msra.mxu0 0.0
        %2134 = vmatprep.subr.mxu0 0.0
        %2135 = vmatpush2.msra.mxu0 0.0
        %2136 = vmatprep.subr.mxu0 0.0
        %2137 = vmatpush2.msra.mxu0 0.0
        %2138 = vmatprep.mubr.f32.mxu0 0.0
        %2139 = vmatmul.mubr.f32.gmra.mxu0 %v2056
        %v2140 = vpop.f32.mrf.mxu0
        %v2141 = vadd.f32 %v2073, %v2140
        %v2142 = vpop.f32.mrf.mxu0
        %2143 = vdwg.mxu0
        %vm2144 = vcmask 0
        %2145 = vst.msk [vmem:[%s360] sm:$0x1] %vm2144, %v2141
        %p2146 = scmp.lt.s32.totalorder %s24, 1
        %s2147 = scalar_select %p2146, %s24, 1
        %s2148 = scalar_lea.vmem %s9, %s2147
        // Predicated region
        $region65: #{tpu_custom_call.1} parent=55 // pred_check
          %p2149 = pneg %p236
        $region66: #{tpu_custom_call.1} parent=55 // pred_check_branch
          %2151 = sbr.rel (%p2149) target = $region68
        $region67: #{tpu_custom_call.1} parent=55 // pred_region
          _
        $region68: #{tpu_custom_call.1} parent=55 // pred_fallthru
          _
      $region56: #{tpu_custom_call.1} parent=5 // pred_fallthru
        _
      %p2152 = scmp.le.s32.totalorder 2, %s19
      // Predicated region
      $region69: #{tpu_custom_call.1} parent=5 // pred_check
        %p2153 = pneg %p2152
      $region70: #{tpu_custom_call.1} parent=5 // pred_check_branch
        %2155 = sbr.rel (%p2153) target = $region72
      $region71: #{tpu_custom_call.1} parent=5 // pred_region
        %s2156 = ssub.s32 %s19, 2
        // Predicated region
        $region73: #{tpu_custom_call.1} parent=71 // pred_check
          %p2157 = pneg %p242
        $region74: #{tpu_custom_call.1} parent=71 // pred_check_branch
          %2159 = sbr.rel (%p2157) target = $region76
        $region75: #{tpu_custom_call.1} parent=71 // pred_region
          %p2160 = scmp.lt.s32.totalorder %s25, 1
          %s2161 = scalar_select %p2160, %s25, 1
          %s2162 = scalar_lea.vmem %s9, %s2161
        $region76: #{tpu_custom_call.1} parent=71 // pred_fallthru
          _
      $region72: #{tpu_custom_call.1} parent=5 // pred_fallthru
        _
    $region6: #{tpu_custom_call.1} parent=1 // loop_footer
      %s23 = sadd.s32 1, %s19
    $region7: #{tpu_custom_call.1} parent=1 // loop_footer_branch
      %18 = sbr.rel target = $region3
    $region8: #{tpu_custom_call.1} parent=1 // loop_exit
      _
    %2163 = vsyncpa [#allocation7], 1
    %s2164 = scalar_lea.sflag [#allocation7], 1
    %2165 = vsyncpa %s2164, 1
    %2166 = vsyncpa [#allocation9], 1

</llo_original>
